<compile_context>
chip_gen: v6e
topology: v6e:2x2x1
jax: 0.10.0
libtpu: 0.0.40
codegen_flags: <defaults>
</compile_context>

<pallas_src>
import jax
import jax.numpy as jnp
from jax.experimental import pallas as pl
from jax.experimental.pallas import tpu as pltpu

_BN_EPS = 1e-5
_ACT_EPS = 1e-6


# --------------------------------------------------------------------------- #
# Kernel                                                                       #
# --------------------------------------------------------------------------- #
def _build_gl_kernel(B, N, D, E, T, gnn_dims, lin_dims):
    n_gnn, n_lin = len(gnn_dims), len(lin_dims)
    n_w = 4 * n_gnn + 2 * n_lin + 2  # (Wself,bself,Wedge,bedge)*gnn + (W,b)*lin + final (W,b)

    def kernel(*refs):
        x_ref, adj_ref, mask_ref, bn_g_ref, bn_b_ref = refs[:5]
        w_refs = refs[5:5 + n_w]
        out_ref = refs[5 + n_w]
        logdet_ref = refs[5 + n_w + 1]
        h_carry = refs[5 + n_w + 2]        # VMEM (B, N, D)  -- state carried across flows
        ld_carry = refs[5 + n_w + 3]       # VMEM (B, 1)     -- accumulated logdet

        t = pl.program_id(0)

        @pl.when(t == 0)
        def _init():
            h_carry[...] = x_ref[...]
            ld_carry[...] = jnp.zeros_like(ld_carry)

        # Current flow input, one (N, C) tile per batch element (B is tiny).
        h_in = [h_carry[b] for b in range(B)]

        # ----------------- ActNorm2D (data-dependent init branch) ----------------- #
        cnt = B * D
        tot = sum(jnp.sum(hb, axis=1, keepdims=True) for hb in h_in)            # (N, 1)
        mean = tot / cnt
        cent = [hb - mean for hb in h_in]
        ss = sum(jnp.sum(cb * cb, axis=1, keepdims=True) for cb in cent)         # (N, 1)
        std = jnp.sqrt(ss / (cnt - 1))                                           # torch.std (unbiased)
        scale = 1.0 / (std + _ACT_EPS)
        x_act = [scale * cb for cb in cent]                                      # scale*(x+loc), loc=-mean
        ld_act = D * jnp.sum(jnp.sum(jnp.log(jnp.abs(scale)), axis=1, keepdims=True),
                             axis=0, keepdims=True)                              # (1, 1)

        # ----------------------- GraphAffineCoupling ------------------------------ #
        mask = mask_ref[0]                                                       # (N, D)
        inv_mask = 1.0 - mask
        masked_x = [xa * mask for xa in x_act]

        def batchnorm_relu(h_list, bn_i):
            # BatchNorm1d(n_node), training-mode batch statistics:
            # per node, stats over (batch, channel).
            c = h_list[0].shape[-1]
            denom = B * c
            tot_n = sum(jnp.sum(hb, axis=1, keepdims=True) for hb in h_list)     # (N, 1)
            mu = tot_n / denom
            dd = [hb - mu for hb in h_list]
            ss_n = sum(jnp.sum(db * db, axis=1, keepdims=True) for db in dd)     # (N, 1)
            rstd = jax.lax.rsqrt(ss_n / denom + _BN_EPS)
            g = bn_g_ref[0, bn_i]                                                # (N, 1)
            beta = bn_b_ref[0, bn_i]                                             # (N, 1)
            return [jnp.maximum(db * rstd * g + beta, 0.0) for db in dd]

        h = masked_x
        w_i, bn_i = 0, 0

        # ---- GraphConv -> BN -> ReLU layers ----
        for U in gnn_dims:
            w_self = w_refs[w_i][0]        # (F, U)
            b_self = w_refs[w_i + 1][0]    # (1, U)
            w_edge = w_refs[w_i + 2][0]    # (F, E*U)   column order: e-major, u-minor
            b_edge = w_refs[w_i + 3][0]    # (1, E*U)
            w_i += 4
            new_h = []
            for b in range(B):
                hb = h[b]                                                        # (N, F)
                hs = jnp.dot(hb, w_self, preferred_element_type=jnp.float32) + b_self
                # fused projection for ALL edge types in one matmul
                m = jnp.dot(hb, w_edge, preferred_element_type=jnp.float32) + b_edge   # (N, E*U)
                # single (N, E*N) @ (E*N, U) message-passing contraction
                m_stack = jnp.concatenate(
                    [m[:, e * U:(e + 1) * U] for e in range(E)], axis=0)         # (E*N, U)
                hr = jnp.dot(adj_ref[b], m_stack, preferred_element_type=jnp.float32)
                new_h.append(hs + hr)
            h = batchnorm_relu(new_h, bn_i)
            bn_i += 1

        # ---- GraphLinear -> BN -> ReLU layers ----
        for _U in lin_dims:
            w_l = w_refs[w_i][0]
            b_l = w_refs[w_i + 1][0]
            w_i += 2
            h = [jnp.dot(hb, w_l, preferred_element_type=jnp.float32) + b_l for hb in h]
            h = batchnorm_relu(h, bn_i)
            bn_i += 1

        # ---- final GraphLinear (-> 2*D channels), chunk, sigmoid, coupling ----
        w_f = w_refs[w_i][0]
        b_f = w_refs[w_i + 1][0]
        h = [jnp.dot(hb, w_f, preferred_element_type=jnp.float32) + b_f for hb in h]    # (N, 2D)

        ld_rows = []
        for b in range(B):
            log_s = h[b][:, :D]
            t_shift = h[b][:, D:]
            s = jax.nn.sigmoid(log_s)
            out_b = masked_x[b] + inv_mask * (x_act[b] + t_shift) * s
            h_carry[b] = out_b
            la = jnp.log(jnp.abs(s))
            ld_rows.append(jnp.sum(jnp.sum(la, axis=1, keepdims=True),
                                   axis=0, keepdims=True))                       # (1, 1)
        ld_coup = jnp.concatenate(ld_rows, axis=0)                               # (B, 1)
        ld_carry[...] = ld_carry[...] + ld_coup + ld_act

        @pl.when(t == T - 1)
        def _finalize():
            out_ref[...] = h_carry[...]
            logdet_ref[...] = ld_carry[...]

    return kernel


# --------------------------------------------------------------------------- #
# Wrapper                                                                      #
# --------------------------------------------------------------------------- #
def gl_forward(params, adj, x, *, gnn_dims, lin_dims):
    """Gl.forward(adj, x) -> (out, logdet) via a single fused pallas_call."""
    B, N, D = x.shape
    E = adj.shape[1]
    T = params["mask"].shape[0]
    n_bn = len(gnn_dims) + len(lin_dims)

    # Lay adjacency out ONCE as (B, N, E*N) (contraction index j = e*N + k) so
    # the message pass is a single matmul per batch element inside the kernel.
    adj_cat = jnp.transpose(adj, (0, 2, 1, 3)).reshape(B, N, E * N)

    kernel = _build_gl_kernel(B, N, D, E, T, gnn_dims, lin_dims)

    in_specs = [
        pl.BlockSpec((B, N, D), lambda t: (0, 0, 0)),          # x (only used at t==0)
        pl.BlockSpec((B, N, E * N), lambda t: (0, 0, 0)),      # adjacency (grid-invariant)
        pl.BlockSpec((1, N, D), lambda t: (t, 0, 0)),          # per-flow coupling mask
        pl.BlockSpec((1, n_bn, N, 1), lambda t: (t, 0, 0, 0)), # BN gamma (per flow, per BN layer)
        pl.BlockSpec((1, n_bn, N, 1), lambda t: (t, 0, 0, 0)), # BN beta
    ]
    inputs = [x, adj_cat, params["mask"], params["bn_gamma"], params["bn_beta"]]
    for w in params["weights"]:
        nd = w.ndim
        in_specs.append(
            pl.BlockSpec((1,) + w.shape[1:],
                         lambda t, _nd=nd: (t,) + (0,) * (_nd - 1)))
        inputs.append(w)

    out_shape = (jax.ShapeDtypeStruct((B, N, D), jnp.float32),
                 jax.ShapeDtypeStruct((B, 1), jnp.float32))
    out_specs = (pl.BlockSpec((B, N, D), lambda t: (0, 0, 0)),
                 pl.BlockSpec((B, 1), lambda t: (0, 0)))

    # Rough cost hint for the XLA scheduler.
    mm = 0
    last = D
    for U in gnn_dims:
        mm += 2 * B * N * last * U            # self projection
        mm += 2 * B * N * last * (E * U)      # fused edge projection
        mm += 2 * B * N * (E * N) * U         # fused adjacency contraction
        last = U
    for U in lin_dims:
        mm += 2 * B * N * last * U
        last = U
    mm += 2 * B * N * last * (2 * D)
    flops = int(T * mm)
    transcendentals = int(T * B * N * (3 * D + 2 * n_bn))
    bytes_accessed = int(sum(a.size * a.dtype.itemsize for a in inputs)
                         + B * N * D * 4 + B * 4)

    out, logdet = pl.pallas_call(
        kernel,
        out_shape=out_shape,
        grid=(T,),
        in_specs=in_specs,
        out_specs=out_specs,
        scratch_shapes=[pltpu.VMEM((B, N, D), jnp.float32),   # carried node features
                        pltpu.VMEM((B, 1), jnp.float32)],     # accumulated logdet
        compiler_params=pltpu.CompilerParams(
            # Flows are sequentially dependent -> the single grid axis must be
            # "arbitrary".  (A parallel batch axis for v7x's 2nd TensorCore is
            # not applicable here since the whole batch fits one grid step.)
            dimension_semantics=("arbitrary",)),
        cost_estimate=pl.CostEstimate(flops=flops,
                                      transcendentals=transcendentals,
                                      bytes_accessed=bytes_accessed),
    )(*inputs)
    return out, logdet[:, 0]


# --------------------------------------------------------------------------- #
# Parameters                                                                   #
# --------------------------------------------------------------------------- #
def init_gl_params(key, *, n_node, in_dim, gnn_dims, lin_dims, edge_types,
                   n_flow, n_block, mask_row_size, mask_row_stride):
    """Deterministic synthetic parameters, stacked over the T flows."""
    T = n_flow * n_block

    # Coupling masks (same schedule in every block, matching BlockOnGraph).
    masks = []
    for _ in range(n_block):
        for j in range(n_flow):
            start = j * mask_row_stride
            rows = [r % n_node for r in range(start, start + mask_row_size)]
            m = jnp.ones((n_node, in_dim), jnp.float32).at[jnp.array(rows)].set(0.0)
            masks.append(m)
    mask = jnp.stack(masks, axis=0)                                   # (T, N, D)

    n_bn = len(gnn_dims) + len(lin_dims)
    bn_gamma = jnp.ones((T, n_bn, n_node, 1), jnp.float32)            # fresh BatchNorm1d affine
    bn_beta = jnp.zeros((T, n_bn, n_node, 1), jnp.float32)

    weights = []
    keys = iter(jax.random.split(key, 4 * (len(gnn_dims) * 2 + len(lin_dims) + 1) + 4))

    def add_linear(fan_in, fan_out):
        k1, k2 = jax.random.split(next(keys))
        bound = 1.0 / (fan_in ** 0.5)
        weights.append(jax.random.uniform(k1, (T, fan_in, fan_out), jnp.float32, -bound, bound))
        weights.append(jax.random.uniform(k2, (T, 1, fan_out), jnp.float32, -bound, bound))

    last = in_dim
    for U in gnn_dims:
        add_linear(last, U)                    # graph_linear_self
        # graph_linear_edge: all edge types fused; columns ordered (edge-major,
        # unit-minor).  Loading PyTorch weights would need a column permutation.
        add_linear(last, U * edge_types)
        last = U
    for U in lin_dims:
        add_linear(last, U)                    # GraphLinear hidden
        last = U
    add_linear(last, 2 * in_dim)               # final GraphLinear (affine=True -> 2*in_dim)

    return {"mask": mask, "bn_gamma": bn_gamma, "bn_beta": bn_beta, "weights": weights}


# --------------------------------------------------------------------------- #
# Pure-JAX reference (mirrors the PyTorch forward semantics)                   #
# --------------------------------------------------------------------------- #
def gl_forward_reference(params, adj, x, *, gnn_dims, lin_dims):
    B, N, D = x.shape
    E = adj.shape[1]
    T = params["mask"].shape[0]
    w_list = params["weights"]

    def bn_train(hh, gamma, beta):
        mu = jnp.mean(hh, axis=(0, 2), keepdims=True)
        var = jnp.mean((hh - mu) ** 2, axis=(0, 2), keepdims=True)
        return (hh - mu) * jax.lax.rsqrt(var + _BN_EPS) * gamma + beta

    h = x
    logdet = jnp.zeros((B,), jnp.float32)
    for t in range(T):
        # ActNorm2D (data-dependent init branch)
        mean = jnp.mean(h, axis=(0, 2), keepdims=True)
        std = jnp.std(h, axis=(0, 2), keepdims=True, ddof=1)
        scale = 1.0 / (std + _ACT_EPS)
        x_act = scale * (h - mean)
        logdet = logdet + D * jnp.sum(jnp.log(jnp.abs(scale)))

        mask = params["mask"][t]
        mx = x_act * mask
        hh = mx
        wi, bi = 0, 0
        for U in gnn_dims:
            ws, bs = w_list[wi][t], w_list[wi + 1][t]
            we, be = w_list[wi + 2][t], w_list[wi + 3][t]
            wi += 4
            hs = jnp.einsum("bnf,fu->bnu", hh, ws) + bs
            m = (jnp.einsum("bnf,fu->bnu", hh, we) + be).reshape(B, N, E, U)
            hr = jnp.einsum("benk,bkeu->bnu", adj, m)
            hh = jax.nn.relu(bn_train(hs + hr,
                                      params["bn_gamma"][t, bi],
                                      params["bn_beta"][t, bi]))
            bi += 1
        for _U in lin_dims:
            w, b = w_list[wi][t], w_list[wi + 1][t]
            wi += 2
            hh = jnp.einsum("bnf,fu->bnu", hh, w) + b
            hh = jax.nn.relu(bn_train(hh,
                                      params["bn_gamma"][t, bi],
                                      params["bn_beta"][t, bi]))
            bi += 1
        w, b = w_list[wi][t], w_list[wi + 1][t]
        hh = jnp.einsum("bnf,fu->bnu", hh, w) + b
        log_s, t_shift = hh[..., :D], hh[..., D:]
        s = jax.nn.sigmoid(log_s)
        out = mx + (1.0 - mask) * (x_act + t_shift) * s
        logdet = logdet + jnp.sum(jnp.log(jnp.abs(s)).reshape(B, -1), axis=1)
        h = out
    return h, logdet


# --------------------------------------------------------------------------- #
# Demo                                                                         #
# --------------------------------------------------------------------------- #
if __name__ == "__main__":
    B = 2            # batch
    N_NODE = 9       # nodes per graph
    IN_DIM = 8       # node-feature channels
    EDGE_TYPES = 4   # bond / edge types
    GNN_DIMS = (32,)        # hidden_dim_dict['gnn']
    LIN_DIMS = (32,)        # hidden_dim_dict['linear']
    N_FLOW = 2
    N_BLOCK = 1
    MASK_ROW_SIZE = 2
    MASK_ROW_STRIDE = 1

    key = jax.random.PRNGKey(0)
    k_params, k_x, k_adj = jax.random.split(key, 3)

    params = init_gl_params(
        k_params, n_node=N_NODE, in_dim=IN_DIM, gnn_dims=GNN_DIMS,
        lin_dims=LIN_DIMS, edge_types=EDGE_TYPES, n_flow=N_FLOW,
        n_block=N_BLOCK, mask_row_size=MASK_ROW_SIZE,
        mask_row_stride=MASK_ROW_STRIDE)

    x = jax.random.normal(k_x, (B, N_NODE, IN_DIM), jnp.float32)
    adj_logits = jax.random.normal(k_adj, (B, EDGE_TYPES, N_NODE, N_NODE), jnp.float32)
    adj = jax.nn.softmax(adj_logits, axis=-1)   # typical row-normalised adjacency

    out, logdet = gl_forward(params, adj, x, gnn_dims=GNN_DIMS, lin_dims=LIN_DIMS)
    out = jax.block_until_ready(out)
    logdet = jax.block_until_ready(logdet)

    ref_out, ref_logdet = gl_forward_reference(params, adj, x,
                                               gnn_dims=GNN_DIMS, lin_dims=LIN_DIMS)

    assert out.shape == (B, N_NODE, IN_DIM)
    assert logdet.shape == (B,)
    assert jnp.allclose(out, ref_out, rtol=5e-3, atol=5e-3), "output mismatch vs JAX reference"
    assert jnp.allclose(logdet, ref_logdet, rtol=5e-3, atol=1e-2), "logdet mismatch vs JAX reference"

    print("KERNEL_OK")
</pallas_src>

<mosaic_0001>
module attributes {stable_mosaic.version = 11 : i64} {
  func.func @kernel(%arg0: i32, %arg1: memref<2x9x8xf32, #tpu.memory_space<vmem>>, %arg2: memref<2x9x36xf32, #tpu.memory_space<vmem>>, %arg3: memref<1x9x8xf32, #tpu.memory_space<vmem>>, %arg4: memref<1x2x9x1xf32, #tpu.memory_space<vmem>>, %arg5: memref<1x2x9x1xf32, #tpu.memory_space<vmem>>, %arg6: memref<1x8x32xf32, #tpu.memory_space<vmem>>, %arg7: memref<1x1x32xf32, #tpu.memory_space<vmem>>, %arg8: memref<1x8x128xf32, #tpu.memory_space<vmem>>, %arg9: memref<1x1x128xf32, #tpu.memory_space<vmem>>, %arg10: memref<1x32x32xf32, #tpu.memory_space<vmem>>, %arg11: memref<1x1x32xf32, #tpu.memory_space<vmem>>, %arg12: memref<1x32x16xf32, #tpu.memory_space<vmem>>, %arg13: memref<1x1x16xf32, #tpu.memory_space<vmem>>, %arg14: memref<2x9x8xf32, #tpu.memory_space<vmem>>, %arg15: memref<2x1xf32, #tpu.memory_space<vmem>>, %arg16: memref<2x9x8xf32, #tpu.memory_space<vmem>>, %arg17: memref<2x1xf32, #tpu.memory_space<vmem>>) attributes {dimension_semantics = [#tpu.dimension_semantics<arbitrary>], iteration_bounds = array<i64: 2>, scalar_prefetch = 0 : i64, scratch_operands = 2 : i64, tpu.core_type = #tpu.core_type<tc>, window_params = [{pipeline_mode = #tpu.pipeline_mode<synchronous>, transform_indices = @transform_0, window_bounds = array<i64: 2, 9, 8>}, {pipeline_mode = #tpu.pipeline_mode<synchronous>, transform_indices = @transform_1, window_bounds = array<i64: 2, 9, 36>}, {transform_indices = @transform_2, window_bounds = array<i64: 1, 9, 8>}, {transform_indices = @transform_3, window_bounds = array<i64: 1, 2, 9, 1>}, {transform_indices = @transform_4, window_bounds = array<i64: 1, 2, 9, 1>}, {transform_indices = @transform_5, window_bounds = array<i64: 1, 8, 32>}, {transform_indices = @transform_6, window_bounds = array<i64: 1, 1, 32>}, {transform_indices = @transform_7, window_bounds = array<i64: 1, 8, 128>}, {transform_indices = @transform_8, window_bounds = array<i64: 1, 1, 128>}, {transform_indices = @transform_9, window_bounds = array<i64: 1, 32, 32>}, {transform_indices = @transform_10, window_bounds = array<i64: 1, 1, 32>}, {transform_indices = @transform_11, window_bounds = array<i64: 1, 32, 16>}, {transform_indices = @transform_12, window_bounds = array<i64: 1, 1, 16>}, {pipeline_mode = #tpu.pipeline_mode<synchronous>, transform_indices = @transform_13, window_bounds = array<i64: 2, 9, 8>}, {pipeline_mode = #tpu.pipeline_mode<synchronous>, transform_indices = @transform_14, window_bounds = array<i64: 2, 1>}]} {
    %c0_i32 = arith.constant 0 : i32
    %0 = arith.cmpi eq, %arg0, %c0_i32 : i32
    %1 = arith.extui %0 : i1 to i32
    %c0_i32_0 = arith.constant 0 : i32
    %2 = arith.cmpi ne, %1, %c0_i32_0 : i32
    scf.if %2 {
      %c0_116 = arith.constant 0 : index
      %c0_117 = arith.constant 0 : index
      %c0_118 = arith.constant 0 : index
      %255 = vector.load %arg1[%c0_116, %c0_117, %c0_118] : memref<2x9x8xf32, #tpu.memory_space<vmem>>, vector<2x9x8xf32>
      %c0_119 = arith.constant 0 : index
      %c0_120 = arith.constant 0 : index
      %c0_121 = arith.constant 0 : index
      %256 = vector.load %arg16[%c0_119, %c0_120, %c0_121] : memref<2x9x8xf32, #tpu.memory_space<vmem>>, vector<2x9x8xf32>
      tpu.vector_store %arg16[%c0_119, %c0_120, %c0_121], %255 {strides = array<i32>} : memref<2x9x8xf32, #tpu.memory_space<vmem>>, vector<2x9x8xf32>,
      %cst_122 = arith.constant 0.000000e+00 : f32
      %257 = vector.broadcast %cst_122 : f32 to vector<2x1xf32>
      %c0_123 = arith.constant 0 : index
      %c0_124 = arith.constant 0 : index
      %258 = vector.load %arg17[%c0_123, %c0_124] : memref<2x1xf32, #tpu.memory_space<vmem>>, vector<2x1xf32>
      tpu.vector_store %arg17[%c0_123, %c0_124], %257 {strides = array<i32>} : memref<2x1xf32, #tpu.memory_space<vmem>>, vector<2x1xf32>,
    } else {
    }
    %c0 = arith.constant 0 : index
    %c0_1 = arith.constant 0 : index
    %c0_2 = arith.constant 0 : index
    %3 = vector.load %arg16[%c0, %c0_1, %c0_2] : memref<2x9x8xf32, #tpu.memory_space<vmem>>, vector<1x9x8xf32>
    %4 = vector.shape_cast %3 : vector<1x9x8xf32> to vector<9x8xf32>
    %c1 = arith.constant 1 : index
    %c0_3 = arith.constant 0 : index
    %c0_4 = arith.constant 0 : index
    %5 = vector.load %arg16[%c1, %c0_3, %c0_4] : memref<2x9x8xf32, #tpu.memory_space<vmem>>, vector<1x9x8xf32>
    %6 = vector.shape_cast %5 : vector<1x9x8xf32> to vector<9x8xf32>
    %cst = arith.constant dense<0.000000e+00> : vector<9xf32>
    %7 = vector.multi_reduction <add>, %4, %cst [1] : vector<9x8xf32> to vector<9xf32>
    %8 = vector.shape_cast %7 : vector<9xf32> to vector<9x1xf32>
    %cst_5 = arith.constant 0.000000e+00 : f32
    %9 = vector.broadcast %cst_5 : f32 to vector<9x1xf32>
    %10 = arith.addf %9, %8 : vector<9x1xf32>
    %cst_6 = arith.constant dense<0.000000e+00> : vector<9xf32>
    %11 = vector.multi_reduction <add>, %6, %cst_6 [1] : vector<9x8xf32> to vector<9xf32>
    %12 = vector.shape_cast %11 : vector<9xf32> to vector<9x1xf32>
    %13 = arith.addf %10, %12 : vector<9x1xf32>
    %cst_7 = arith.constant 1.600000e+01 : f32
    %14 = vector.broadcast %cst_7 : f32 to vector<9x1xf32>
    %15 = arith.divf %13, %14 : vector<9x1xf32>
    %16 = vector.broadcast %15 : vector<9x1xf32> to vector<9x8xf32>
    %17 = arith.subf %4, %16 : vector<9x8xf32>
    %18 = vector.broadcast %15 : vector<9x1xf32> to vector<9x8xf32>
    %19 = arith.subf %6, %18 : vector<9x8xf32>
    %20 = arith.mulf %17, %17 : vector<9x8xf32>
    %cst_8 = arith.constant dense<0.000000e+00> : vector<9xf32>
    %21 = vector.multi_reduction <add>, %20, %cst_8 [1] : vector<9x8xf32> to vector<9xf32>
    %22 = vector.shape_cast %21 : vector<9xf32> to vector<9x1xf32>
    %cst_9 = arith.constant 0.000000e+00 : f32
    %23 = vector.broadcast %cst_9 : f32 to vector<9x1xf32>
    %24 = arith.addf %23, %22 : vector<9x1xf32>
    %25 = arith.mulf %19, %19 : vector<9x8xf32>
    %cst_10 = arith.constant dense<0.000000e+00> : vector<9xf32>
    %26 = vector.multi_reduction <add>, %25, %cst_10 [1] : vector<9x8xf32> to vector<9xf32>
    %27 = vector.shape_cast %26 : vector<9xf32> to vector<9x1xf32>
    %28 = arith.addf %24, %27 : vector<9x1xf32>
    %cst_11 = arith.constant 1.500000e+01 : f32
    %29 = vector.broadcast %cst_11 : f32 to vector<9x1xf32>
    %30 = arith.divf %28, %29 : vector<9x1xf32>
    %31 = math.sqrt %30 : vector<9x1xf32>
    %cst_12 = arith.constant 9.99999997E-7 : f32
    %32 = vector.broadcast %cst_12 : f32 to vector<9x1xf32>
    %33 = arith.addf %31, %32 : vector<9x1xf32>
    %cst_13 = arith.constant 1.000000e+00 : f32
    %34 = vector.broadcast %cst_13 : f32 to vector<9x1xf32>
    %35 = arith.divf %34, %33 : vector<9x1xf32>
    %36 = vector.broadcast %35 : vector<9x1xf32> to vector<9x8xf32>
    %37 = arith.mulf %36, %17 : vector<9x8xf32>
    %38 = vector.broadcast %35 : vector<9x1xf32> to vector<9x8xf32>
    %39 = arith.mulf %38, %19 : vector<9x8xf32>
    %40 = math.absf %35 : vector<9x1xf32>
    %41 = math.log %40 : vector<9x1xf32>
    %cst_14 = arith.constant dense<0.000000e+00> : vector<9xf32>
    %42 = vector.multi_reduction <add>, %41, %cst_14 [1] : vector<9x1xf32> to vector<9xf32>
    %43 = vector.shape_cast %42 : vector<9xf32> to vector<9x1xf32>
    %cst_15 = arith.constant dense<0.000000e+00> : vector<1xf32>
    %44 = vector.multi_reduction <add>, %43, %cst_15 [0] : vector<9x1xf32> to vector<1xf32>
    %45 = vector.shape_cast %44 : vector<1xf32> to vector<1x1xf32>
    %cst_16 = arith.constant 8.000000e+00 : f32
    %46 = vector.broadcast %cst_16 : f32 to vector<1x1xf32>
    %47 = arith.mulf %46, %45 : vector<1x1xf32>
    %c0_17 = arith.constant 0 : index
    %c0_18 = arith.constant 0 : index
    %c0_19 = arith.constant 0 : index
    %48 = vector.load %arg3[%c0_17, %c0_18, %c0_19] : memref<1x9x8xf32, #tpu.memory_space<vmem>>, vector<1x9x8xf32>
    %49 = vector.shape_cast %48 : vector<1x9x8xf32> to vector<9x8xf32>
    %cst_20 = arith.constant 1.000000e+00 : f32
    %50 = vector.broadcast %cst_20 : f32 to vector<9x8xf32>
    %51 = arith.subf %50, %49 : vector<9x8xf32>
    %52 = arith.mulf %37, %49 : vector<9x8xf32>
    %53 = arith.mulf %39, %49 : vector<9x8xf32>
    %c0_21 = arith.constant 0 : index
    %c0_22 = arith.constant 0 : index
    %c0_23 = arith.constant 0 : index
    %54 = vector.load %arg6[%c0_21, %c0_22, %c0_23] : memref<1x8x32xf32, #tpu.memory_space<vmem>>, vector<1x8x32xf32>
    %55 = vector.shape_cast %54 : vector<1x8x32xf32> to vector<8x32xf32>
    %c0_24 = arith.constant 0 : index
    %c0_25 = arith.constant 0 : index
    %c0_26 = arith.constant 0 : index
    %56 = vector.load %arg7[%c0_24, %c0_25, %c0_26] : memref<1x1x32xf32, #tpu.memory_space<vmem>>, vector<1x1x32xf32>
    %57 = vector.shape_cast %56 : vector<1x1x32xf32> to vector<1x32xf32>
    %c0_27 = arith.constant 0 : index
    %c0_28 = arith.constant 0 : index
    %c0_29 = arith.constant 0 : index
    %58 = vector.load %arg8[%c0_27, %c0_28, %c0_29] : memref<1x8x128xf32, #tpu.memory_space<vmem>>, vector<1x8x128xf32>
    %59 = vector.shape_cast %58 : vector<1x8x128xf32> to vector<8x128xf32>
    %c0_30 = arith.constant 0 : index
    %c0_31 = arith.constant 0 : index
    %c0_32 = arith.constant 0 : index
    %60 = vector.load %arg9[%c0_30, %c0_31, %c0_32] : memref<1x1x128xf32, #tpu.memory_space<vmem>>, vector<1x1x128xf32>
    %61 = vector.shape_cast %60 : vector<1x1x128xf32> to vector<1x128xf32>
    %cst_33 = arith.constant dense<0.000000e+00> : vector<9x32xf32>
    %62 = tpu.matmul %52, %55, %cst_33 {dimension_numbers = #tpu.dot_dimension_numbers<[1], [0], [0], [1], [0, 0, 1, 1], [], []>} : vector<9x8xf32>, vector<8x32xf32>, vector<9x32xf32> -> vector<9x32xf32>
    %63 = vector.broadcast %57 : vector<1x32xf32> to vector<9x32xf32>
    %64 = arith.addf %62, %63 : vector<9x32xf32>
    %cst_34 = arith.constant dense<0.000000e+00> : vector<9x128xf32>
    %65 = tpu.matmul %52, %59, %cst_34 {dimension_numbers = #tpu.dot_dimension_numbers<[1], [0], [0], [1], [0, 0, 1, 1], [], []>} : vector<9x8xf32>, vector<8x128xf32>, vector<9x128xf32> -> vector<9x128xf32>
    %66 = vector.broadcast %61 : vector<1x128xf32> to vector<9x128xf32>
    %67 = arith.addf %65, %66 : vector<9x128xf32>
    %68 = vector.extract_strided_slice %67 {offsets = [0, 0], sizes = [9, 32], strides = [1, 1]} : vector<9x128xf32> to vector<9x32xf32>
    %69 = vector.extract_strided_slice %67 {offsets = [0, 32], sizes = [9, 32], strides = [1, 1]} : vector<9x128xf32> to vector<9x32xf32>
    %70 = vector.extract_strided_slice %67 {offsets = [0, 64], sizes = [9, 32], strides = [1, 1]} : vector<9x128xf32> to vector<9x32xf32>
    %71 = vector.extract_strided_slice %67 {offsets = [0, 96], sizes = [9, 32], strides = [1, 1]} : vector<9x128xf32> to vector<9x32xf32>
    %72 = tpu.concatenate %68, %69, %70, %71 in 0 : vector<9x32xf32>, vector<9x32xf32>, vector<9x32xf32>, vector<9x32xf32> -> vector<36x32xf32>
    %c0_35 = arith.constant 0 : index
    %c0_36 = arith.constant 0 : index
    %c0_37 = arith.constant 0 : index
    %73 = vector.load %arg2[%c0_35, %c0_36, %c0_37] : memref<2x9x36xf32, #tpu.memory_space<vmem>>, vector<1x9x36xf32>
    %74 = vector.shape_cast %73 : vector<1x9x36xf32> to vector<9x36xf32>
    %cst_38 = arith.constant dense<0.000000e+00> : vector<9x32xf32>
    %75 = tpu.matmul %74, %72, %cst_38 {dimension_numbers = #tpu.dot_dimension_numbers<[1], [0], [0], [1], [0, 0, 1, 1], [], []>} : vector<9x36xf32>, vector<36x32xf32>, vector<9x32xf32> -> vector<9x32xf32>
    %76 = arith.addf %64, %75 : vector<9x32xf32>
    %cst_39 = arith.constant dense<0.000000e+00> : vector<9x32xf32>
    %77 = tpu.matmul %53, %55, %cst_39 {dimension_numbers = #tpu.dot_dimension_numbers<[1], [0], [0], [1], [0, 0, 1, 1], [], []>} : vector<9x8xf32>, vector<8x32xf32>, vector<9x32xf32> -> vector<9x32xf32>
    %78 = vector.broadcast %57 : vector<1x32xf32> to vector<9x32xf32>
    %79 = arith.addf %77, %78 : vector<9x32xf32>
    %cst_40 = arith.constant dense<0.000000e+00> : vector<9x128xf32>
    %80 = tpu.matmul %53, %59, %cst_40 {dimension_numbers = #tpu.dot_dimension_numbers<[1], [0], [0], [1], [0, 0, 1, 1], [], []>} : vector<9x8xf32>, vector<8x128xf32>, vector<9x128xf32> -> vector<9x128xf32>
    %81 = vector.broadcast %61 : vector<1x128xf32> to vector<9x128xf32>
    %82 = arith.addf %80, %81 : vector<9x128xf32>
    %83 = vector.extract_strided_slice %82 {offsets = [0, 0], sizes = [9, 32], strides = [1, 1]} : vector<9x128xf32> to vector<9x32xf32>
    %84 = vector.extract_strided_slice %82 {offsets = [0, 32], sizes = [9, 32], strides = [1, 1]} : vector<9x128xf32> to vector<9x32xf32>
    %85 = vector.extract_strided_slice %82 {offsets = [0, 64], sizes = [9, 32], strides = [1, 1]} : vector<9x128xf32> to vector<9x32xf32>
    %86 = vector.extract_strided_slice %82 {offsets = [0, 96], sizes = [9, 32], strides = [1, 1]} : vector<9x128xf32> to vector<9x32xf32>
    %87 = tpu.concatenate %83, %84, %85, %86 in 0 : vector<9x32xf32>, vector<9x32xf32>, vector<9x32xf32>, vector<9x32xf32> -> vector<36x32xf32>
    %c1_41 = arith.constant 1 : index
    %c0_42 = arith.constant 0 : index
    %c0_43 = arith.constant 0 : index
    %88 = vector.load %arg2[%c1_41, %c0_42, %c0_43] : memref<2x9x36xf32, #tpu.memory_space<vmem>>, vector<1x9x36xf32>
    %89 = vector.shape_cast %88 : vector<1x9x36xf32> to vector<9x36xf32>
    %cst_44 = arith.constant dense<0.000000e+00> : vector<9x32xf32>
    %90 = tpu.matmul %89, %87, %cst_44 {dimension_numbers = #tpu.dot_dimension_numbers<[1], [0], [0], [1], [0, 0, 1, 1], [], []>} : vector<9x36xf32>, vector<36x32xf32>, vector<9x32xf32> -> vector<9x32xf32>
    %91 = arith.addf %79, %90 : vector<9x32xf32>
    %cst_45 = arith.constant dense<0.000000e+00> : vector<9xf32>
    %92 = vector.multi_reduction <add>, %76, %cst_45 [1] : vector<9x32xf32> to vector<9xf32>
    %93 = vector.shape_cast %92 : vector<9xf32> to vector<9x1xf32>
    %cst_46 = arith.constant 0.000000e+00 : f32
    %94 = vector.broadcast %cst_46 : f32 to vector<9x1xf32>
    %95 = arith.addf %94, %93 : vector<9x1xf32>
    %cst_47 = arith.constant dense<0.000000e+00> : vector<9xf32>
    %96 = vector.multi_reduction <add>, %91, %cst_47 [1] : vector<9x32xf32> to vector<9xf32>
    %97 = vector.shape_cast %96 : vector<9xf32> to vector<9x1xf32>
    %98 = arith.addf %95, %97 : vector<9x1xf32>
    %cst_48 = arith.constant 6.400000e+01 : f32
    %99 = vector.broadcast %cst_48 : f32 to vector<9x1xf32>
    %100 = arith.divf %98, %99 : vector<9x1xf32>
    %101 = vector.broadcast %100 : vector<9x1xf32> to vector<9x32xf32>
    %102 = arith.subf %76, %101 : vector<9x32xf32>
    %103 = vector.broadcast %100 : vector<9x1xf32> to vector<9x32xf32>
    %104 = arith.subf %91, %103 : vector<9x32xf32>
    %105 = arith.mulf %102, %102 : vector<9x32xf32>
    %cst_49 = arith.constant dense<0.000000e+00> : vector<9xf32>
    %106 = vector.multi_reduction <add>, %105, %cst_49 [1] : vector<9x32xf32> to vector<9xf32>
    %107 = vector.shape_cast %106 : vector<9xf32> to vector<9x1xf32>
    %cst_50 = arith.constant 0.000000e+00 : f32
    %108 = vector.broadcast %cst_50 : f32 to vector<9x1xf32>
    %109 = arith.addf %108, %107 : vector<9x1xf32>
    %110 = arith.mulf %104, %104 : vector<9x32xf32>
    %cst_51 = arith.constant dense<0.000000e+00> : vector<9xf32>
    %111 = vector.multi_reduction <add>, %110, %cst_51 [1] : vector<9x32xf32> to vector<9xf32>
    %112 = vector.shape_cast %111 : vector<9xf32> to vector<9x1xf32>
    %113 = arith.addf %109, %112 : vector<9x1xf32>
    %cst_52 = arith.constant 6.400000e+01 : f32
    %114 = vector.broadcast %cst_52 : f32 to vector<9x1xf32>
    %115 = arith.divf %113, %114 : vector<9x1xf32>
    %cst_53 = arith.constant 9.99999974E-6 : f32
    %116 = vector.broadcast %cst_53 : f32 to vector<9x1xf32>
    %117 = arith.addf %115, %116 : vector<9x1xf32>
    %118 = math.rsqrt %117 : vector<9x1xf32>
    %c0_54 = arith.constant 0 : index
    %c0_55 = arith.constant 0 : index
    %c0_56 = arith.constant 0 : index
    %c0_57 = arith.constant 0 : index
    %119 = vector.load %arg4[%c0_54, %c0_55, %c0_56, %c0_57] : memref<1x2x9x1xf32, #tpu.memory_space<vmem>>, vector<1x1x9x1xf32>
    %120 = vector.shape_cast %119 : vector<1x1x9x1xf32> to vector<9x1xf32>
    %c0_58 = arith.constant 0 : index
    %c0_59 = arith.constant 0 : index
    %c0_60 = arith.constant 0 : index
    %c0_61 = arith.constant 0 : index
    %121 = vector.load %arg5[%c0_58, %c0_59, %c0_60, %c0_61] : memref<1x2x9x1xf32, #tpu.memory_space<vmem>>, vector<1x1x9x1xf32>
    %122 = vector.shape_cast %121 : vector<1x1x9x1xf32> to vector<9x1xf32>
    %123 = vector.broadcast %118 : vector<9x1xf32> to vector<9x32xf32>
    %124 = arith.mulf %102, %123 : vector<9x32xf32>
    %125 = vector.broadcast %120 : vector<9x1xf32> to vector<9x32xf32>
    %126 = arith.mulf %124, %125 : vector<9x32xf32>
    %127 = vector.broadcast %122 : vector<9x1xf32> to vector<9x32xf32>
    %128 = arith.addf %126, %127 : vector<9x32xf32>
    %cst_62 = arith.constant 0.000000e+00 : f32
    %129 = vector.broadcast %cst_62 : f32 to vector<9x32xf32>
    %130 = arith.maximumf %128, %129 : vector<9x32xf32>
    %131 = vector.broadcast %118 : vector<9x1xf32> to vector<9x32xf32>
    %132 = arith.mulf %104, %131 : vector<9x32xf32>
    %133 = vector.broadcast %120 : vector<9x1xf32> to vector<9x32xf32>
    %134 = arith.mulf %132, %133 : vector<9x32xf32>
    %135 = vector.broadcast %122 : vector<9x1xf32> to vector<9x32xf32>
    %136 = arith.addf %134, %135 : vector<9x32xf32>
    %cst_63 = arith.constant 0.000000e+00 : f32
    %137 = vector.broadcast %cst_63 : f32 to vector<9x32xf32>
    %138 = arith.maximumf %136, %137 : vector<9x32xf32>
    %c0_64 = arith.constant 0 : index
    %c0_65 = arith.constant 0 : index
    %c0_66 = arith.constant 0 : index
    %139 = vector.load %arg10[%c0_64, %c0_65, %c0_66] : memref<1x32x32xf32, #tpu.memory_space<vmem>>, vector<1x32x32xf32>
    %140 = vector.shape_cast %139 : vector<1x32x32xf32> to vector<32x32xf32>
    %c0_67 = arith.constant 0 : index
    %c0_68 = arith.constant 0 : index
    %c0_69 = arith.constant 0 : index
    %141 = vector.load %arg11[%c0_67, %c0_68, %c0_69] : memref<1x1x32xf32, #tpu.memory_space<vmem>>, vector<1x1x32xf32>
    %142 = vector.shape_cast %141 : vector<1x1x32xf32> to vector<1x32xf32>
    %cst_70 = arith.constant dense<0.000000e+00> : vector<9x32xf32>
    %143 = tpu.matmul %130, %140, %cst_70 {dimension_numbers = #tpu.dot_dimension_numbers<[1], [0], [0], [1], [0, 0, 1, 1], [], []>} : vector<9x32xf32>, vector<32x32xf32>, vector<9x32xf32> -> vector<9x32xf32>
    %144 = vector.broadcast %142 : vector<1x32xf32> to vector<9x32xf32>
    %145 = arith.addf %143, %144 : vector<9x32xf32>
    %cst_71 = arith.constant dense<0.000000e+00> : vector<9x32xf32>
    %146 = tpu.matmul %138, %140, %cst_71 {dimension_numbers = #tpu.dot_dimension_numbers<[1], [0], [0], [1], [0, 0, 1, 1], [], []>} : vector<9x32xf32>, vector<32x32xf32>, vector<9x32xf32> -> vector<9x32xf32>
    %147 = vector.broadcast %142 : vector<1x32xf32> to vector<9x32xf32>
    %148 = arith.addf %146, %147 : vector<9x32xf32>
    %cst_72 = arith.constant dense<0.000000e+00> : vector<9xf32>
    %149 = vector.multi_reduction <add>, %145, %cst_72 [1] : vector<9x32xf32> to vector<9xf32>
    %150 = vector.shape_cast %149 : vector<9xf32> to vector<9x1xf32>
    %cst_73 = arith.constant 0.000000e+00 : f32
    %151 = vector.broadcast %cst_73 : f32 to vector<9x1xf32>
    %152 = arith.addf %151, %150 : vector<9x1xf32>
    %cst_74 = arith.constant dense<0.000000e+00> : vector<9xf32>
    %153 = vector.multi_reduction <add>, %148, %cst_74 [1] : vector<9x32xf32> to vector<9xf32>
    %154 = vector.shape_cast %153 : vector<9xf32> to vector<9x1xf32>
    %155 = arith.addf %152, %154 : vector<9x1xf32>
    %cst_75 = arith.constant 6.400000e+01 : f32
    %156 = vector.broadcast %cst_75 : f32 to vector<9x1xf32>
    %157 = arith.divf %155, %156 : vector<9x1xf32>
    %158 = vector.broadcast %157 : vector<9x1xf32> to vector<9x32xf32>
    %159 = arith.subf %145, %158 : vector<9x32xf32>
    %160 = vector.broadcast %157 : vector<9x1xf32> to vector<9x32xf32>
    %161 = arith.subf %148, %160 : vector<9x32xf32>
    %162 = arith.mulf %159, %159 : vector<9x32xf32>
    %cst_76 = arith.constant dense<0.000000e+00> : vector<9xf32>
    %163 = vector.multi_reduction <add>, %162, %cst_76 [1] : vector<9x32xf32> to vector<9xf32>
    %164 = vector.shape_cast %163 : vector<9xf32> to vector<9x1xf32>
    %cst_77 = arith.constant 0.000000e+00 : f32
    %165 = vector.broadcast %cst_77 : f32 to vector<9x1xf32>
    %166 = arith.addf %165, %164 : vector<9x1xf32>
    %167 = arith.mulf %161, %161 : vector<9x32xf32>
    %cst_78 = arith.constant dense<0.000000e+00> : vector<9xf32>
    %168 = vector.multi_reduction <add>, %167, %cst_78 [1] : vector<9x32xf32> to vector<9xf32>
    %169 = vector.shape_cast %168 : vector<9xf32> to vector<9x1xf32>
    %170 = arith.addf %166, %169 : vector<9x1xf32>
    %cst_79 = arith.constant 6.400000e+01 : f32
    %171 = vector.broadcast %cst_79 : f32 to vector<9x1xf32>
    %172 = arith.divf %170, %171 : vector<9x1xf32>
    %cst_80 = arith.constant 9.99999974E-6 : f32
    %173 = vector.broadcast %cst_80 : f32 to vector<9x1xf32>
    %174 = arith.addf %172, %173 : vector<9x1xf32>
    %175 = math.rsqrt %174 : vector<9x1xf32>
    %c0_81 = arith.constant 0 : index
    %c1_82 = arith.constant 1 : index
    %c0_83 = arith.constant 0 : index
    %c0_84 = arith.constant 0 : index
    %176 = vector.load %arg4[%c0_81, %c1_82, %c0_83, %c0_84] : memref<1x2x9x1xf32, #tpu.memory_space<vmem>>, vector<1x1x9x1xf32>
    %177 = vector.shape_cast %176 : vector<1x1x9x1xf32> to vector<9x1xf32>
    %c0_85 = arith.constant 0 : index
    %c1_86 = arith.constant 1 : index
    %c0_87 = arith.constant 0 : index
    %c0_88 = arith.constant 0 : index
    %178 = vector.load %arg5[%c0_85, %c1_86, %c0_87, %c0_88] : memref<1x2x9x1xf32, #tpu.memory_space<vmem>>, vector<1x1x9x1xf32>
    %179 = vector.shape_cast %178 : vector<1x1x9x1xf32> to vector<9x1xf32>
    %180 = vector.broadcast %175 : vector<9x1xf32> to vector<9x32xf32>
    %181 = arith.mulf %159, %180 : vector<9x32xf32>
    %182 = vector.broadcast %177 : vector<9x1xf32> to vector<9x32xf32>
    %183 = arith.mulf %181, %182 : vector<9x32xf32>
    %184 = vector.broadcast %179 : vector<9x1xf32> to vector<9x32xf32>
    %185 = arith.addf %183, %184 : vector<9x32xf32>
    %cst_89 = arith.constant 0.000000e+00 : f32
    %186 = vector.broadcast %cst_89 : f32 to vector<9x32xf32>
    %187 = arith.maximumf %185, %186 : vector<9x32xf32>
    %188 = vector.broadcast %175 : vector<9x1xf32> to vector<9x32xf32>
    %189 = arith.mulf %161, %188 : vector<9x32xf32>
    %190 = vector.broadcast %177 : vector<9x1xf32> to vector<9x32xf32>
    %191 = arith.mulf %189, %190 : vector<9x32xf32>
    %192 = vector.broadcast %179 : vector<9x1xf32> to vector<9x32xf32>
    %193 = arith.addf %191, %192 : vector<9x32xf32>
    %cst_90 = arith.constant 0.000000e+00 : f32
    %194 = vector.broadcast %cst_90 : f32 to vector<9x32xf32>
    %195 = arith.maximumf %193, %194 : vector<9x32xf32>
    %c0_91 = arith.constant 0 : index
    %c0_92 = arith.constant 0 : index
    %c0_93 = arith.constant 0 : index
    %196 = vector.load %arg12[%c0_91, %c0_92, %c0_93] : memref<1x32x16xf32, #tpu.memory_space<vmem>>, vector<1x32x16xf32>
    %197 = vector.shape_cast %196 : vector<1x32x16xf32> to vector<32x16xf32>
    %c0_94 = arith.constant 0 : index
    %c0_95 = arith.constant 0 : index
    %c0_96 = arith.constant 0 : index
    %198 = vector.load %arg13[%c0_94, %c0_95, %c0_96] : memref<1x1x16xf32, #tpu.memory_space<vmem>>, vector<1x1x16xf32>
    %199 = vector.shape_cast %198 : vector<1x1x16xf32> to vector<1x16xf32>
    %cst_97 = arith.constant dense<0.000000e+00> : vector<9x16xf32>
    %200 = tpu.matmul %187, %197, %cst_97 {dimension_numbers = #tpu.dot_dimension_numbers<[1], [0], [0], [1], [0, 0, 1, 1], [], []>} : vector<9x32xf32>, vector<32x16xf32>, vector<9x16xf32> -> vector<9x16xf32>
    %201 = vector.broadcast %199 : vector<1x16xf32> to vector<9x16xf32>
    %202 = arith.addf %200, %201 : vector<9x16xf32>
    %cst_98 = arith.constant dense<0.000000e+00> : vector<9x16xf32>
    %203 = tpu.matmul %195, %197, %cst_98 {dimension_numbers = #tpu.dot_dimension_numbers<[1], [0], [0], [1], [0, 0, 1, 1], [], []>} : vector<9x32xf32>, vector<32x16xf32>, vector<9x16xf32> -> vector<9x16xf32>
    %204 = vector.broadcast %199 : vector<1x16xf32> to vector<9x16xf32>
    %205 = arith.addf %203, %204 : vector<9x16xf32>
    %206 = vector.extract_strided_slice %202 {offsets = [0, 0], sizes = [9, 8], strides = [1, 1]} : vector<9x16xf32> to vector<9x8xf32>
    %207 = vector.extract_strided_slice %202 {offsets = [0, 8], sizes = [9, 8], strides = [1, 1]} : vector<9x16xf32> to vector<9x8xf32>
    %208 = arith.negf %206 : vector<9x8xf32>
    %209 = math.exp %208 : vector<9x8xf32>
    %cst_99 = arith.constant 1.000000e+00 : f32
    %210 = vector.broadcast %cst_99 : f32 to vector<9x8xf32>
    %211 = arith.addf %210, %209 : vector<9x8xf32>
    %212 = arith.divf %210, %211 : vector<9x8xf32>
    %213 = arith.addf %37, %207 : vector<9x8xf32>
    %214 = arith.mulf %51, %213 : vector<9x8xf32>
    %215 = arith.mulf %214, %212 : vector<9x8xf32>
    %216 = arith.addf %52, %215 : vector<9x8xf32>
    %c0_100 = arith.constant 0 : index
    %c0_101 = arith.constant 0 : index
    %c0_102 = arith.constant 0 : index
    %217 = vector.load %arg16[%c0_100, %c0_101, %c0_102] : memref<2x9x8xf32, #tpu.memory_space<vmem>>, vector<1x9x8xf32>
    %218 = vector.shape_cast %217 : vector<1x9x8xf32> to vector<9x8xf32>
    %219 = vector.shape_cast %216 : vector<9x8xf32> to vector<1x9x8xf32>
    tpu.vector_store %arg16[%c0_100, %c0_101, %c0_102], %219 {strides = array<i32>} : memref<2x9x8xf32, #tpu.memory_space<vmem>>, vector<1x9x8xf32>,
    %220 = math.absf %212 : vector<9x8xf32>
    %221 = math.log %220 : vector<9x8xf32>
    %cst_103 = arith.constant dense<0.000000e+00> : vector<9xf32>
    %222 = vector.multi_reduction <add>, %221, %cst_103 [1] : vector<9x8xf32> to vector<9xf32>
    %223 = vector.shape_cast %222 : vector<9xf32> to vector<9x1xf32>
    %cst_104 = arith.constant dense<0.000000e+00> : vector<1xf32>
    %224 = vector.multi_reduction <add>, %223, %cst_104 [0] : vector<9x1xf32> to vector<1xf32>
    %225 = vector.shape_cast %224 : vector<1xf32> to vector<1x1xf32>
    %226 = vector.extract_strided_slice %205 {offsets = [0, 0], sizes = [9, 8], strides = [1, 1]} : vector<9x16xf32> to vector<9x8xf32>
    %227 = vector.extract_strided_slice %205 {offsets = [0, 8], sizes = [9, 8], strides = [1, 1]} : vector<9x16xf32> to vector<9x8xf32>
    %228 = arith.negf %226 : vector<9x8xf32>
    %229 = math.exp %228 : vector<9x8xf32>
    %cst_105 = arith.constant 1.000000e+00 : f32
    %230 = vector.broadcast %cst_105 : f32 to vector<9x8xf32>
    %231 = arith.addf %230, %229 : vector<9x8xf32>
    %232 = arith.divf %230, %231 : vector<9x8xf32>
    %233 = arith.addf %39, %227 : vector<9x8xf32>
    %234 = arith.mulf %51, %233 : vector<9x8xf32>
    %235 = arith.mulf %234, %232 : vector<9x8xf32>
    %236 = arith.addf %53, %235 : vector<9x8xf32>
    %c1_106 = arith.constant 1 : index
    %c0_107 = arith.constant 0 : index
    %c0_108 = arith.constant 0 : index
    %237 = vector.load %arg16[%c1_106, %c0_107, %c0_108] : memref<2x9x8xf32, #tpu.memory_space<vmem>>, vector<1x9x8xf32>
    %238 = vector.shape_cast %237 : vector<1x9x8xf32> to vector<9x8xf32>
    %239 = vector.shape_cast %236 : vector<9x8xf32> to vector<1x9x8xf32>
    tpu.vector_store %arg16[%c1_106, %c0_107, %c0_108], %239 {strides = array<i32>} : memref<2x9x8xf32, #tpu.memory_space<vmem>>, vector<1x9x8xf32>,
    %240 = math.absf %232 : vector<9x8xf32>
    %241 = math.log %240 : vector<9x8xf32>
    %cst_109 = arith.constant dense<0.000000e+00> : vector<9xf32>
    %242 = vector.multi_reduction <add>, %241, %cst_109 [1] : vector<9x8xf32> to vector<9xf32>
    %243 = vector.shape_cast %242 : vector<9xf32> to vector<9x1xf32>
    %cst_110 = arith.constant dense<0.000000e+00> : vector<1xf32>
    %244 = vector.multi_reduction <add>, %243, %cst_110 [0] : vector<9x1xf32> to vector<1xf32>
    %245 = vector.shape_cast %244 : vector<1xf32> to vector<1x1xf32>
    %246 = tpu.concatenate %225, %245 in 0 : vector<1x1xf32>, vector<1x1xf32> -> vector<2x1xf32>
    %c0_111 = arith.constant 0 : index
    %c0_112 = arith.constant 0 : index
    %247 = vector.load %arg17[%c0_111, %c0_112] : memref<2x1xf32, #tpu.memory_space<vmem>>, vector<2x1xf32>
    %248 = arith.addf %247, %246 : vector<2x1xf32>
    %249 = vector.broadcast %47 : vector<1x1xf32> to vector<2x1xf32>
    %250 = arith.addf %248, %249 : vector<2x1xf32>
    %c0_113 = arith.constant 0 : index
    %c0_114 = arith.constant 0 : index
    %251 = vector.load %arg17[%c0_113, %c0_114] : memref<2x1xf32, #tpu.memory_space<vmem>>, vector<2x1xf32>
    tpu.vector_store %arg17[%c0_113, %c0_114], %250 {strides = array<i32>} : memref<2x1xf32, #tpu.memory_space<vmem>>, vector<2x1xf32>,
    %c1_i32 = arith.constant 1 : i32
    %252 = arith.cmpi eq, %arg0, %c1_i32 : i32
    %253 = arith.extui %252 : i1 to i32
    %c0_i32_115 = arith.constant 0 : i32
    %254 = arith.cmpi ne, %253, %c0_i32_115 : i32
    scf.if %254 {
      %c0_116 = arith.constant 0 : index
      %c0_117 = arith.constant 0 : index
      %c0_118 = arith.constant 0 : index
      %255 = vector.load %arg16[%c0_116, %c0_117, %c0_118] : memref<2x9x8xf32, #tpu.memory_space<vmem>>, vector<2x9x8xf32>
      %c0_119 = arith.constant 0 : index
      %c0_120 = arith.constant 0 : index
      %c0_121 = arith.constant 0 : index
      %256 = vector.load %arg14[%c0_119, %c0_120, %c0_121] : memref<2x9x8xf32, #tpu.memory_space<vmem>>, vector<2x9x8xf32>
      tpu.vector_store %arg14[%c0_119, %c0_120, %c0_121], %255 {strides = array<i32>} : memref<2x9x8xf32, #tpu.memory_space<vmem>>, vector<2x9x8xf32>,
      %c0_122 = arith.constant 0 : index
      %c0_123 = arith.constant 0 : index
      %257 = vector.load %arg17[%c0_122, %c0_123] : memref<2x1xf32, #tpu.memory_space<vmem>>, vector<2x1xf32>
      %c0_124 = arith.constant 0 : index
      %c0_125 = arith.constant 0 : index
      %258 = vector.load %arg15[%c0_124, %c0_125] : memref<2x1xf32, #tpu.memory_space<vmem>>, vector<2x1xf32>
      tpu.vector_store %arg15[%c0_124, %c0_125], %257 {strides = array<i32>} : memref<2x1xf32, #tpu.memory_space<vmem>>, vector<2x1xf32>,
    } else {
    }
    return
  }
  func.func @transform_0(%arg0: i32) -> (i32, i32, i32) {
    %c0_i32 = arith.constant 0 : i32
    %c0_i32_0 = arith.constant 0 : i32
    %c0_i32_1 = arith.constant 0 : i32
    %c0_i32_2 = arith.constant 0 : i32
    return %c0_i32, %c0_i32_0, %c0_i32_1 : i32, i32, i32
  }
  func.func @transform_1(%arg0: i32) -> (i32, i32, i32) {
    %c0_i32 = arith.constant 0 : i32
    %c0_i32_0 = arith.constant 0 : i32
    %c0_i32_1 = arith.constant 0 : i32
    %c0_i32_2 = arith.constant 0 : i32
    return %c0_i32, %c0_i32_0, %c0_i32_1 : i32, i32, i32
  }
  func.func @transform_2(%arg0: i32) -> (i32, i32, i32) {
    %c0_i32 = arith.constant 0 : i32
    %c0_i32_0 = arith.constant 0 : i32
    %c0_i32_1 = arith.constant 0 : i32
    return %arg0, %c0_i32, %c0_i32_0 : i32, i32, i32
  }
  func.func @transform_3(%arg0: i32) -> (i32, i32, i32, i32) {
    %c0_i32 = arith.constant 0 : i32
    %c0_i32_0 = arith.constant 0 : i32
    %c0_i32_1 = arith.constant 0 : i32
    %c0_i32_2 = arith.constant 0 : i32
    return %arg0, %c0_i32, %c0_i32_0, %c0_i32_1 : i32, i32, i32, i32
  }
  func.func @transform_4(%arg0: i32) -> (i32, i32, i32, i32) {
    %c0_i32 = arith.constant 0 : i32
    %c0_i32_0 = arith.constant 0 : i32
    %c0_i32_1 = arith.constant 0 : i32
    %c0_i32_2 = arith.constant 0 : i32
    return %arg0, %c0_i32, %c0_i32_0, %c0_i32_1 : i32, i32, i32, i32
  }
  func.func @transform_5(%arg0: i32) -> (i32, i32, i32) {
    %c0_i32 = arith.constant 0 : i32
    %c0_i32_0 = arith.constant 0 : i32
    %c0_i32_1 = arith.constant 0 : i32
    return %arg0, %c0_i32, %c0_i32_0 : i32, i32, i32
  }
  func.func @transform_6(%arg0: i32) -> (i32, i32, i32) {
    %c0_i32 = arith.constant 0 : i32
    %c0_i32_0 = arith.constant 0 : i32
    %c0_i32_1 = arith.constant 0 : i32
    return %arg0, %c0_i32, %c0_i32_0 : i32, i32, i32
  }
  func.func @transform_7(%arg0: i32) -> (i32, i32, i32) {
    %c0_i32 = arith.constant 0 : i32
    %c0_i32_0 = arith.constant 0 : i32
    %c0_i32_1 = arith.constant 0 : i32
    return %arg0, %c0_i32, %c0_i32_0 : i32, i32, i32
  }
  func.func @transform_8(%arg0: i32) -> (i32, i32, i32) {
    %c0_i32 = arith.constant 0 : i32
    %c0_i32_0 = arith.constant 0 : i32
    %c0_i32_1 = arith.constant 0 : i32
    return %arg0, %c0_i32, %c0_i32_0 : i32, i32, i32
  }
  func.func @transform_9(%arg0: i32) -> (i32, i32, i32) {
    %c0_i32 = arith.constant 0 : i32
    %c0_i32_0 = arith.constant 0 : i32
    %c0_i32_1 = arith.constant 0 : i32
    return %arg0, %c0_i32, %c0_i32_0 : i32, i32, i32
  }
  func.func @transform_10(%arg0: i32) -> (i32, i32, i32) {
    %c0_i32 = arith.constant 0 : i32
    %c0_i32_0 = arith.constant 0 : i32
    %c0_i32_1 = arith.constant 0 : i32
    return %arg0, %c0_i32, %c0_i32_0 : i32, i32, i32
  }
  func.func @transform_11(%arg0: i32) -> (i32, i32, i32) {
    %c0_i32 = arith.constant 0 : i32
    %c0_i32_0 = arith.constant 0 : i32
    %c0_i32_1 = arith.constant 0 : i32
    return %arg0, %c0_i32, %c0_i32_0 : i32, i32, i32
  }
  func.func @transform_12(%arg0: i32) -> (i32, i32, i32) {
    %c0_i32 = arith.constant 0 : i32
    %c0_i32_0 = arith.constant 0 : i32
    %c0_i32_1 = arith.constant 0 : i32
    return %arg0, %c0_i32, %c0_i32_0 : i32, i32, i32
  }
  func.func @transform_13(%arg0: i32) -> (i32, i32, i32) {
    %c0_i32 = arith.constant 0 : i32
    %c0_i32_0 = arith.constant 0 : i32
    %c0_i32_1 = arith.constant 0 : i32
    %c0_i32_2 = arith.constant 0 : i32
    return %c0_i32, %c0_i32_0, %c0_i32_1 : i32, i32, i32
  }
  func.func @transform_14(%arg0: i32) -> (i32, i32) {
    %c0_i32 = arith.constant 0 : i32
    %c0_i32_0 = arith.constant 0 : i32
    %c0_i32_1 = arith.constant 0 : i32
    return %c0_i32, %c0_i32_0 : i32, i32
  }
}

</mosaic_0001>

<llo_original>
// kernel: tpu_custom_call.1
$region0: #{tpu_custom_call.1}
  #allocation0 [shape = 'u32[]', space=smem, size = 0x4, offset = 0x4, fixed_abs, tag = 'smem constant byte address 0x4 - core index']
  #allocation1 [shape = 'u32[144,128]{1,0:T(1,128)}', space=vmem, size = 0x12000, scoped, tag = 'internal scratch']
  #allocation2 [shape = 'f32[2,9,8]{2,1,0:T(8,128)}', space=vmem, size = 0x4000, scoped, tag = 'scratch operand']
  #allocation3 [shape = 'f32[2,1]{1,0:T(2,128)}', space=vmem, size = 0x400, scoped, tag = 'scratch operand']
  %s0 = inlined_call_operand.vmem [shape: f32[2,9,8], index: 0, kind: input, shape index: {}]
  %s1 = inlined_call_operand.vmem [shape: f32[2,9,36], index: 1, kind: input, shape index: {}]
  %s2 = inlined_call_operand.vmem [shape: f32[2,9,8], index: 2, kind: input, shape index: {}]
  %s3 = inlined_call_operand.vmem [shape: f32[2,2,9,1], index: 3, kind: input, shape index: {}]
  %s4 = inlined_call_operand.vmem [shape: f32[2,2,9,1], index: 4, kind: input, shape index: {}]
  %s5 = inlined_call_operand.vmem [shape: f32[2,8,32], index: 5, kind: input, shape index: {}]
  %s6 = inlined_call_operand.vmem [shape: f32[2,1,32], index: 6, kind: input, shape index: {}]
  %s7 = inlined_call_operand.vmem [shape: f32[2,8,128], index: 7, kind: input, shape index: {}]
  %s8 = inlined_call_operand.vmem [shape: f32[2,1,128], index: 8, kind: input, shape index: {}]
  %s9 = inlined_call_operand.vmem [shape: f32[2,32,32], index: 9, kind: input, shape index: {}]
  %s10 = inlined_call_operand.vmem [shape: f32[2,1,32], index: 10, kind: input, shape index: {}]
  %s11 = inlined_call_operand.vmem [shape: f32[2,32,16], index: 11, kind: input, shape index: {}]
  %s12 = inlined_call_operand.vmem [shape: f32[2,1,16], index: 12, kind: input, shape index: {}]
  %s13 = inlined_call_operand.vmem [shape: f32[2,9,8], index: 13, kind: output, shape index: {0}]
  %s14 = inlined_call_operand.vmem [shape: f32[2,1], index: 14, kind: output, shape index: {1}]
  %15 = xla_tuple %s13, %s14
  %s16 = sld [smem:[#allocation0]]
  $region101: #{tpu_custom_call.1} parent=0
    _
  %s18 = ssub.s32 1, %s16
  %s19 = scalar_select 0, %s18, %s16
  loop: start=0, step=1, limit=4
  $region2: #{tpu_custom_call.1} parent=0 // loop_pre_header
    _
  $region3: #{tpu_custom_call.1} parent=0 // loop_header
    %s21 = sphi 0, %s25
    %p22 = scmp.ge.s32.totalorder %s21, 4
    %s29 = sphi 0, %s29
    %s31 = sphi 0, %s29
    %s32 = sphi 0, %s31
    %s46 = sphi 0, %s32
    %s50 = sphi 0, %s50
    %s52 = sphi 0, %s50
    %s53 = sphi 0, %s52
    %s67 = sphi 0, %s53
    %s73 = sphi 0, %s75
    %s76 = sphi 0, %s73
    %s77 = sphi 0, %s76
    %s93 = sphi 0, %s77
    %s99 = sphi 0, %s101
    %s102 = sphi 0, %s99
    %s103 = sphi 0, %s102
    %s119 = sphi 0, %s103
    %s125 = sphi 0, %s127
    %s128 = sphi 0, %s125
    %s129 = sphi 0, %s128
    %s145 = sphi 0, %s129
    %s151 = sphi 0, %s153
    %s154 = sphi 0, %s151
    %s155 = sphi 0, %s154
    %s171 = sphi 0, %s155
    %s177 = sphi 0, %s179
    %s180 = sphi 0, %s177
    %s181 = sphi 0, %s180
    %s197 = sphi 0, %s181
    %s203 = sphi 0, %s205
    %s206 = sphi 0, %s203
    %s207 = sphi 0, %s206
    %s223 = sphi 0, %s207
    %s229 = sphi 0, %s231
    %s232 = sphi 0, %s229
    %s233 = sphi 0, %s232
    %s249 = sphi 0, %s233
    %s255 = sphi 0, %s257
    %s258 = sphi 0, %s255
    %s259 = sphi 0, %s258
    %s275 = sphi 0, %s259
    %s281 = sphi 0, %s283
    %s284 = sphi 0, %s281
    %s285 = sphi 0, %s284
    %s301 = sphi 0, %s285
    %s307 = sphi 0, %s309
    %s310 = sphi 0, %s307
    %s311 = sphi 0, %s310
    %s327 = sphi 0, %s311
    %s333 = sphi 0, %s335
    %s336 = sphi 0, %s333
    %s337 = sphi 0, %s336
    %s353 = sphi 0, %s337
    %s357 = sphi 0, %s357
    %s359 = sphi 0, %s357
    %s360 = sphi 0, %s359
    %s374 = sphi 0, %s360
    %s378 = sphi 0, %s378
    %s380 = sphi 0, %s378
    %s381 = sphi 0, %s380
    %s395 = sphi 0, %s381
  $region4: #{tpu_custom_call.1} parent=0 // loop_header_branch
    %24 = sbr.rel (%p22) target = $region8
  $region5: #{tpu_custom_call.1} parent=0 // loop_body
    %s26 = ssub.s32 %s21, 1
    %s27 = ssub.s32 %s21, 2
    %s28 = sadd.s32 %s21, 1
    %s30 = sadd.s32 %s29, 1
    %p33 = scmp.eq.s32.totalorder %s21, 1
    %p34 = scmp.ne.s32.totalorder %s29, %s31
    %p35 = scmp.eq.s32.totalorder %s21, 0
    %p36 = por %p34, %p35
    %p37 = scmp.ne.s32.totalorder %s29, %s31
    %p38 = scmp.eq.s32.totalorder %s26, 1
    %p39 = por %p37, %p38
    %p40 = scmp.ne.s32.totalorder %s31, %s32
    %p41 = scmp.eq.s32.totalorder %s26, 0
    %p42 = por %p40, %p41
    %p43 = scmp.ne.s32.totalorder %s31, %s32
    %p44 = scmp.eq.s32.totalorder %s27, 1
    %p45 = por %p43, %p44
    %p47 = scmp.ne.s32.totalorder %s32, %s46
    %p48 = scmp.eq.s32.totalorder %s27, 0
    %p49 = por %p47, %p48
    %s51 = sadd.s32 %s50, 1
    %p54 = scmp.eq.s32.totalorder %s21, 1
    %p55 = scmp.ne.s32.totalorder %s50, %s52
    %p56 = scmp.eq.s32.totalorder %s21, 0
    %p57 = por %p55, %p56
    %p58 = scmp.ne.s32.totalorder %s50, %s52
    %p59 = scmp.eq.s32.totalorder %s26, 1
    %p60 = por %p58, %p59
    %p61 = scmp.ne.s32.totalorder %s52, %s53
    %p62 = scmp.eq.s32.totalorder %s26, 0
    %p63 = por %p61, %p62
    %p64 = scmp.ne.s32.totalorder %s52, %s53
    %p65 = scmp.eq.s32.totalorder %s27, 1
    %p66 = por %p64, %p65
    %p68 = scmp.ne.s32.totalorder %s53, %s67
    %p69 = scmp.eq.s32.totalorder %s27, 0
    %p70 = por %p68, %p69
    %s71 = ssub.s32 %s21, %s28
    %p72 = scmp.eq.s32.totalorder %s71, 0
    %s74 = sadd.s32 %s73, 1
    %s75 = scalar_select %p72, %s73, %s74
    %p78 = pneg %p72
    %p79 = scmp.eq.s32.totalorder %s21, 1
    %p80 = por %p78, %p79
    %p81 = scmp.ne.s32.totalorder %s73, %s76
    %p82 = scmp.eq.s32.totalorder %s21, 0
    %p83 = por %p81, %p82
    %p84 = scmp.ne.s32.totalorder %s73, %s76
    %p85 = scmp.eq.s32.totalorder %s26, 1
    %p86 = por %p84, %p85
    %p87 = scmp.ne.s32.totalorder %s76, %s77
    %p88 = scmp.eq.s32.totalorder %s26, 0
    %p89 = por %p87, %p88
    %p90 = scmp.ne.s32.totalorder %s76, %s77
    %p91 = scmp.eq.s32.totalorder %s27, 1
    %p92 = por %p90, %p91
    %p94 = scmp.ne.s32.totalorder %s77, %s93
    %p95 = scmp.eq.s32.totalorder %s27, 0
    %p96 = por %p94, %p95
    %s97 = ssub.s32 %s21, %s28
    %p98 = scmp.eq.s32.totalorder %s97, 0
    %s100 = sadd.s32 %s99, 1
    %s101 = scalar_select %p98, %s99, %s100
    %p104 = pneg %p98
    %p105 = scmp.eq.s32.totalorder %s21, 1
    %p106 = por %p104, %p105
    %p107 = scmp.ne.s32.totalorder %s99, %s102
    %p108 = scmp.eq.s32.totalorder %s21, 0
    %p109 = por %p107, %p108
    %p110 = scmp.ne.s32.totalorder %s99, %s102
    %p111 = scmp.eq.s32.totalorder %s26, 1
    %p112 = por %p110, %p111
    %p113 = scmp.ne.s32.totalorder %s102, %s103
    %p114 = scmp.eq.s32.totalorder %s26, 0
    %p115 = por %p113, %p114
    %p116 = scmp.ne.s32.totalorder %s102, %s103
    %p117 = scmp.eq.s32.totalorder %s27, 1
    %p118 = por %p116, %p117
    %p120 = scmp.ne.s32.totalorder %s103, %s119
    %p121 = scmp.eq.s32.totalorder %s27, 0
    %p122 = por %p120, %p121
    %s123 = ssub.s32 %s21, %s28
    %p124 = scmp.eq.s32.totalorder %s123, 0
    %s126 = sadd.s32 %s125, 1
    %s127 = scalar_select %p124, %s125, %s126
    %p130 = pneg %p124
    %p131 = scmp.eq.s32.totalorder %s21, 1
    %p132 = por %p130, %p131
    %p133 = scmp.ne.s32.totalorder %s125, %s128
    %p134 = scmp.eq.s32.totalorder %s21, 0
    %p135 = por %p133, %p134
    %p136 = scmp.ne.s32.totalorder %s125, %s128
    %p137 = scmp.eq.s32.totalorder %s26, 1
    %p138 = por %p136, %p137
    %p139 = scmp.ne.s32.totalorder %s128, %s129
    %p140 = scmp.eq.s32.totalorder %s26, 0
    %p141 = por %p139, %p140
    %p142 = scmp.ne.s32.totalorder %s128, %s129
    %p143 = scmp.eq.s32.totalorder %s27, 1
    %p144 = por %p142, %p143
    %p146 = scmp.ne.s32.totalorder %s129, %s145
    %p147 = scmp.eq.s32.totalorder %s27, 0
    %p148 = por %p146, %p147
    %s149 = ssub.s32 %s21, %s28
    %p150 = scmp.eq.s32.totalorder %s149, 0
    %s152 = sadd.s32 %s151, 1
    %s153 = scalar_select %p150, %s151, %s152
    %p156 = pneg %p150
    %p157 = scmp.eq.s32.totalorder %s21, 1
    %p158 = por %p156, %p157
    %p159 = scmp.ne.s32.totalorder %s151, %s154
    %p160 = scmp.eq.s32.totalorder %s21, 0
    %p161 = por %p159, %p160
    %p162 = scmp.ne.s32.totalorder %s151, %s154
    %p163 = scmp.eq.s32.totalorder %s26, 1
    %p164 = por %p162, %p163
    %p165 = scmp.ne.s32.totalorder %s154, %s155
    %p166 = scmp.eq.s32.totalorder %s26, 0
    %p167 = por %p165, %p166
    %p168 = scmp.ne.s32.totalorder %s154, %s155
    %p169 = scmp.eq.s32.totalorder %s27, 1
    %p170 = por %p168, %p169
    %p172 = scmp.ne.s32.totalorder %s155, %s171
    %p173 = scmp.eq.s32.totalorder %s27, 0
    %p174 = por %p172, %p173
    %s175 = ssub.s32 %s21, %s28
    %p176 = scmp.eq.s32.totalorder %s175, 0
    %s178 = sadd.s32 %s177, 1
    %s179 = scalar_select %p176, %s177, %s178
    %p182 = pneg %p176
    %p183 = scmp.eq.s32.totalorder %s21, 1
    %p184 = por %p182, %p183
    %p185 = scmp.ne.s32.totalorder %s177, %s180
    %p186 = scmp.eq.s32.totalorder %s21, 0
    %p187 = por %p185, %p186
    %p188 = scmp.ne.s32.totalorder %s177, %s180
    %p189 = scmp.eq.s32.totalorder %s26, 1
    %p190 = por %p188, %p189
    %p191 = scmp.ne.s32.totalorder %s180, %s181
    %p192 = scmp.eq.s32.totalorder %s26, 0
    %p193 = por %p191, %p192
    %p194 = scmp.ne.s32.totalorder %s180, %s181
    %p195 = scmp.eq.s32.totalorder %s27, 1
    %p196 = por %p194, %p195
    %p198 = scmp.ne.s32.totalorder %s181, %s197
    %p199 = scmp.eq.s32.totalorder %s27, 0
    %p200 = por %p198, %p199
    %s201 = ssub.s32 %s21, %s28
    %p202 = scmp.eq.s32.totalorder %s201, 0
    %s204 = sadd.s32 %s203, 1
    %s205 = scalar_select %p202, %s203, %s204
    %p208 = pneg %p202
    %p209 = scmp.eq.s32.totalorder %s21, 1
    %p210 = por %p208, %p209
    %p211 = scmp.ne.s32.totalorder %s203, %s206
    %p212 = scmp.eq.s32.totalorder %s21, 0
    %p213 = por %p211, %p212
    %p214 = scmp.ne.s32.totalorder %s203, %s206
    %p215 = scmp.eq.s32.totalorder %s26, 1
    %p216 = por %p214, %p215
    %p217 = scmp.ne.s32.totalorder %s206, %s207
    %p218 = scmp.eq.s32.totalorder %s26, 0
    %p219 = por %p217, %p218
    %p220 = scmp.ne.s32.totalorder %s206, %s207
    %p221 = scmp.eq.s32.totalorder %s27, 1
    %p222 = por %p220, %p221
    %p224 = scmp.ne.s32.totalorder %s207, %s223
    %p225 = scmp.eq.s32.totalorder %s27, 0
    %p226 = por %p224, %p225
    %s227 = ssub.s32 %s21, %s28
    %p228 = scmp.eq.s32.totalorder %s227, 0
    %s230 = sadd.s32 %s229, 1
    %s231 = scalar_select %p228, %s229, %s230
    %p234 = pneg %p228
    %p235 = scmp.eq.s32.totalorder %s21, 1
    %p236 = por %p234, %p235
    %p237 = scmp.ne.s32.totalorder %s229, %s232
    %p238 = scmp.eq.s32.totalorder %s21, 0
    %p239 = por %p237, %p238
    %p240 = scmp.ne.s32.totalorder %s229, %s232
    %p241 = scmp.eq.s32.totalorder %s26, 1
    %p242 = por %p240, %p241
    %p243 = scmp.ne.s32.totalorder %s232, %s233
    %p244 = scmp.eq.s32.totalorder %s26, 0
    %p245 = por %p243, %p244
    %p246 = scmp.ne.s32.totalorder %s232, %s233
    %p247 = scmp.eq.s32.totalorder %s27, 1
    %p248 = por %p246, %p247
    %p250 = scmp.ne.s32.totalorder %s233, %s249
    %p251 = scmp.eq.s32.totalorder %s27, 0
    %p252 = por %p250, %p251
    %s253 = ssub.s32 %s21, %s28
    %p254 = scmp.eq.s32.totalorder %s253, 0
    %s256 = sadd.s32 %s255, 1
    %s257 = scalar_select %p254, %s255, %s256
    %p260 = pneg %p254
    %p261 = scmp.eq.s32.totalorder %s21, 1
    %p262 = por %p260, %p261
    %p263 = scmp.ne.s32.totalorder %s255, %s258
    %p264 = scmp.eq.s32.totalorder %s21, 0
    %p265 = por %p263, %p264
    %p266 = scmp.ne.s32.totalorder %s255, %s258
    %p267 = scmp.eq.s32.totalorder %s26, 1
    %p268 = por %p266, %p267
    %p269 = scmp.ne.s32.totalorder %s258, %s259
    %p270 = scmp.eq.s32.totalorder %s26, 0
    %p271 = por %p269, %p270
    %p272 = scmp.ne.s32.totalorder %s258, %s259
    %p273 = scmp.eq.s32.totalorder %s27, 1
    %p274 = por %p272, %p273
    %p276 = scmp.ne.s32.totalorder %s259, %s275
    %p277 = scmp.eq.s32.totalorder %s27, 0
    %p278 = por %p276, %p277
    %s279 = ssub.s32 %s21, %s28
    %p280 = scmp.eq.s32.totalorder %s279, 0
    %s282 = sadd.s32 %s281, 1
    %s283 = scalar_select %p280, %s281, %s282
    %p286 = pneg %p280
    %p287 = scmp.eq.s32.totalorder %s21, 1
    %p288 = por %p286, %p287
    %p289 = scmp.ne.s32.totalorder %s281, %s284
    %p290 = scmp.eq.s32.totalorder %s21, 0
    %p291 = por %p289, %p290
    %p292 = scmp.ne.s32.totalorder %s281, %s284
    %p293 = scmp.eq.s32.totalorder %s26, 1
    %p294 = por %p292, %p293
    %p295 = scmp.ne.s32.totalorder %s284, %s285
    %p296 = scmp.eq.s32.totalorder %s26, 0
    %p297 = por %p295, %p296
    %p298 = scmp.ne.s32.totalorder %s284, %s285
    %p299 = scmp.eq.s32.totalorder %s27, 1
    %p300 = por %p298, %p299
    %p302 = scmp.ne.s32.totalorder %s285, %s301
    %p303 = scmp.eq.s32.totalorder %s27, 0
    %p304 = por %p302, %p303
    %s305 = ssub.s32 %s21, %s28
    %p306 = scmp.eq.s32.totalorder %s305, 0
    %s308 = sadd.s32 %s307, 1
    %s309 = scalar_select %p306, %s307, %s308
    %p312 = pneg %p306
    %p313 = scmp.eq.s32.totalorder %s21, 1
    %p314 = por %p312, %p313
    %p315 = scmp.ne.s32.totalorder %s307, %s310
    %p316 = scmp.eq.s32.totalorder %s21, 0
    %p317 = por %p315, %p316
    %p318 = scmp.ne.s32.totalorder %s307, %s310
    %p319 = scmp.eq.s32.totalorder %s26, 1
    %p320 = por %p318, %p319
    %p321 = scmp.ne.s32.totalorder %s310, %s311
    %p322 = scmp.eq.s32.totalorder %s26, 0
    %p323 = por %p321, %p322
    %p324 = scmp.ne.s32.totalorder %s310, %s311
    %p325 = scmp.eq.s32.totalorder %s27, 1
    %p326 = por %p324, %p325
    %p328 = scmp.ne.s32.totalorder %s311, %s327
    %p329 = scmp.eq.s32.totalorder %s27, 0
    %p330 = por %p328, %p329
    %s331 = ssub.s32 %s21, %s28
    %p332 = scmp.eq.s32.totalorder %s331, 0
    %s334 = sadd.s32 %s333, 1
    %s335 = scalar_select %p332, %s333, %s334
    %p338 = pneg %p332
    %p339 = scmp.eq.s32.totalorder %s21, 1
    %p340 = por %p338, %p339
    %p341 = scmp.ne.s32.totalorder %s333, %s336
    %p342 = scmp.eq.s32.totalorder %s21, 0
    %p343 = por %p341, %p342
    %p344 = scmp.ne.s32.totalorder %s333, %s336
    %p345 = scmp.eq.s32.totalorder %s26, 1
    %p346 = por %p344, %p345
    %p347 = scmp.ne.s32.totalorder %s336, %s337
    %p348 = scmp.eq.s32.totalorder %s26, 0
    %p349 = por %p347, %p348
    %p350 = scmp.ne.s32.totalorder %s336, %s337
    %p351 = scmp.eq.s32.totalorder %s27, 1
    %p352 = por %p350, %p351
    %p354 = scmp.ne.s32.totalorder %s337, %s353
    %p355 = scmp.eq.s32.totalorder %s27, 0
    %p356 = por %p354, %p355
    %s358 = sadd.s32 %s357, 1
    %p361 = scmp.eq.s32.totalorder %s21, 1
    %p362 = scmp.ne.s32.totalorder %s357, %s359
    %p363 = scmp.eq.s32.totalorder %s21, 0
    %p364 = por %p362, %p363
    %p365 = scmp.ne.s32.totalorder %s357, %s359
    %p366 = scmp.eq.s32.totalorder %s26, 1
    %p367 = por %p365, %p366
    %p368 = scmp.ne.s32.totalorder %s359, %s360
    %p369 = scmp.eq.s32.totalorder %s26, 0
    %p370 = por %p368, %p369
    %p371 = scmp.ne.s32.totalorder %s359, %s360
    %p372 = scmp.eq.s32.totalorder %s27, 1
    %p373 = por %p371, %p372
    %p375 = scmp.ne.s32.totalorder %s360, %s374
    %p376 = scmp.eq.s32.totalorder %s27, 0
    %p377 = por %p375, %p376
    %s379 = sadd.s32 %s378, 1
    %p382 = scmp.eq.s32.totalorder %s21, 1
    %p383 = scmp.ne.s32.totalorder %s378, %s380
    %p384 = scmp.eq.s32.totalorder %s21, 0
    %p385 = por %p383, %p384
    %p386 = scmp.ne.s32.totalorder %s378, %s380
    %p387 = scmp.eq.s32.totalorder %s26, 1
    %p388 = por %p386, %p387
    %p389 = scmp.ne.s32.totalorder %s380, %s381
    %p390 = scmp.eq.s32.totalorder %s26, 0
    %p391 = por %p389, %p390
    %p392 = scmp.ne.s32.totalorder %s380, %s381
    %p393 = scmp.eq.s32.totalorder %s27, 1
    %p394 = por %p392, %p393
    %p396 = scmp.ne.s32.totalorder %s381, %s395
    %p397 = scmp.eq.s32.totalorder %s27, 0
    %p398 = por %p396, %p397
    %p399 = scmp.le.s32.totalorder 1, %s21
    %p400 = scmp.lt.s32.totalorder %s21, 3
    %p401 = pnand %p399, %p400
    %p402 = pneg %p401
    // Predicated region
    $region9: #{tpu_custom_call.1} parent=5 // pred_check
      _
    $region10: #{tpu_custom_call.1} parent=5 // pred_check_branch
      %404 = sbr.rel (%p401) target = $region12
    $region11: #{tpu_custom_call.1} parent=5 // pred_region
      %s405 = ssub.s32 %s21, 1
      // Predicated region
      $region13: #{tpu_custom_call.1} parent=11 // pred_check
        %p406 = pneg %p42
      $region14: #{tpu_custom_call.1} parent=11 // pred_check_branch
        %408 = sbr.rel (%p406) target = $region16
      $region15: #{tpu_custom_call.1} parent=11 // pred_region
        _
      $region16: #{tpu_custom_call.1} parent=11 // pred_fallthru
        _
      // Predicated region
      $region17: #{tpu_custom_call.1} parent=11 // pred_check
        %p409 = pneg %p63
      $region18: #{tpu_custom_call.1} parent=11 // pred_check_branch
        %411 = sbr.rel (%p409) target = $region20
      $region19: #{tpu_custom_call.1} parent=11 // pred_region
        _
      $region20: #{tpu_custom_call.1} parent=11 // pred_fallthru
        _
    $region12: #{tpu_custom_call.1} parent=5 // pred_fallthru
      _
    %p412 = scmp.lt.s32.totalorder %s21, 2
    // Predicated region
    $region21: #{tpu_custom_call.1} parent=5 // pred_check
      %p413 = pneg %p412
    $region22: #{tpu_custom_call.1} parent=5 // pred_check_branch
      %415 = sbr.rel (%p413) target = $region24
    $region23: #{tpu_custom_call.1} parent=5 // pred_region
      // Predicated region
      $region25: #{tpu_custom_call.1} parent=23 // pred_check
        %p416 = pneg %p83
      $region26: #{tpu_custom_call.1} parent=23 // pred_check_branch
        %418 = sbr.rel (%p416) target = $region28
      $region27: #{tpu_custom_call.1} parent=23 // pred_region
        %p419 = scmp.lt.s32.totalorder %s21, 1
        %s420 = scalar_select %p419, %s21, 1
        %s421 = smul.addr %s420, 2
        %s422 = smul.addr %s421, 8
        %s423 = scalar_lea.vmem %s2, %s422
      $region28: #{tpu_custom_call.1} parent=23 // pred_fallthru
        _
      // Predicated region
      $region29: #{tpu_custom_call.1} parent=23 // pred_check
        %p424 = pneg %p109
      $region30: #{tpu_custom_call.1} parent=23 // pred_check_branch
        %426 = sbr.rel (%p424) target = $region32
      $region31: #{tpu_custom_call.1} parent=23 // pred_region
        %p427 = scmp.lt.s32.totalorder %s21, 1
        %s428 = scalar_select %p427, %s21, 1
        %s429 = smul.addr %s428, 4
        %s430 = smul.addr %s429, 8
        %s431 = scalar_lea.vmem %s3, %s430
      $region32: #{tpu_custom_call.1} parent=23 // pred_fallthru
        _
      // Predicated region
      $region33: #{tpu_custom_call.1} parent=23 // pred_check
        %p432 = pneg %p135
      $region34: #{tpu_custom_call.1} parent=23 // pred_check_branch
        %434 = sbr.rel (%p432) target = $region36
      $region35: #{tpu_custom_call.1} parent=23 // pred_region
        %p435 = scmp.lt.s32.totalorder %s21, 1
        %s436 = scalar_select %p435, %s21, 1
        %s437 = smul.addr %s436, 4
        %s438 = smul.addr %s437, 8
        %s439 = scalar_lea.vmem %s4, %s438
      $region36: #{tpu_custom_call.1} parent=23 // pred_fallthru
        _
      // Predicated region
      $region37: #{tpu_custom_call.1} parent=23 // pred_check
        %p440 = pneg %p161
      $region38: #{tpu_custom_call.1} parent=23 // pred_check_branch
        %442 = sbr.rel (%p440) target = $region40
      $region39: #{tpu_custom_call.1} parent=23 // pred_region
        %p443 = scmp.lt.s32.totalorder %s21, 1
        %s444 = scalar_select %p443, %s21, 1
        %s445 = smul.addr %s444, 8
        %s446 = scalar_lea.vmem %s5, %s445
      $region40: #{tpu_custom_call.1} parent=23 // pred_fallthru
        _
      // Predicated region
      $region41: #{tpu_custom_call.1} parent=23 // pred_check
        %p447 = pneg %p187
      $region42: #{tpu_custom_call.1} parent=23 // pred_check_branch
        %449 = sbr.rel (%p447) target = $region44
      $region43: #{tpu_custom_call.1} parent=23 // pred_region
        %p450 = scmp.lt.s32.totalorder %s21, 1
        %s451 = scalar_select %p450, %s21, 1
        %s452 = scalar_lea.vmem %s6, %s451
      $region44: #{tpu_custom_call.1} parent=23 // pred_fallthru
        _
      // Predicated region
      $region45: #{tpu_custom_call.1} parent=23 // pred_check
        %p453 = pneg %p213
      $region46: #{tpu_custom_call.1} parent=23 // pred_check_branch
        %455 = sbr.rel (%p453) target = $region48
      $region47: #{tpu_custom_call.1} parent=23 // pred_region
        %p456 = scmp.lt.s32.totalorder %s21, 1
        %s457 = scalar_select %p456, %s21, 1
        %s458 = smul.addr %s457, 8
        %s459 = scalar_lea.vmem %s7, %s458
      $region48: #{tpu_custom_call.1} parent=23 // pred_fallthru
        _
      // Predicated region
      $region49: #{tpu_custom_call.1} parent=23 // pred_check
        %p460 = pneg %p239
      $region50: #{tpu_custom_call.1} parent=23 // pred_check_branch
        %462 = sbr.rel (%p460) target = $region52
      $region51: #{tpu_custom_call.1} parent=23 // pred_region
        %p463 = scmp.lt.s32.totalorder %s21, 1
        %s464 = scalar_select %p463, %s21, 1
        %s465 = scalar_lea.vmem %s8, %s464
      $region52: #{tpu_custom_call.1} parent=23 // pred_fallthru
        _
      // Predicated region
      $region53: #{tpu_custom_call.1} parent=23 // pred_check
        %p466 = pneg %p265
      $region54: #{tpu_custom_call.1} parent=23 // pred_check_branch
        %468 = sbr.rel (%p466) target = $region56
      $region55: #{tpu_custom_call.1} parent=23 // pred_region
        %p469 = scmp.lt.s32.totalorder %s21, 1
        %s470 = scalar_select %p469, %s21, 1
        %s471 = smul.addr %s470, 4
        %s472 = smul.addr %s471, 8
        %s473 = scalar_lea.vmem %s9, %s472
      $region56: #{tpu_custom_call.1} parent=23 // pred_fallthru
        _
      // Predicated region
      $region57: #{tpu_custom_call.1} parent=23 // pred_check
        %p474 = pneg %p291
      $region58: #{tpu_custom_call.1} parent=23 // pred_check_branch
        %476 = sbr.rel (%p474) target = $region60
      $region59: #{tpu_custom_call.1} parent=23 // pred_region
        %p477 = scmp.lt.s32.totalorder %s21, 1
        %s478 = scalar_select %p477, %s21, 1
        %s479 = scalar_lea.vmem %s10, %s478
      $region60: #{tpu_custom_call.1} parent=23 // pred_fallthru
        _
      // Predicated region
      $region61: #{tpu_custom_call.1} parent=23 // pred_check
        %p480 = pneg %p317
      $region62: #{tpu_custom_call.1} parent=23 // pred_check_branch
        %482 = sbr.rel (%p480) target = $region64
      $region63: #{tpu_custom_call.1} parent=23 // pred_region
        %p483 = scmp.lt.s32.totalorder %s21, 1
        %s484 = scalar_select %p483, %s21, 1
        %s485 = smul.addr %s484, 4
        %s486 = smul.addr %s485, 8
        %s487 = scalar_lea.vmem %s11, %s486
      $region64: #{tpu_custom_call.1} parent=23 // pred_fallthru
        _
      // Predicated region
      $region65: #{tpu_custom_call.1} parent=23 // pred_check
        %p488 = pneg %p343
      $region66: #{tpu_custom_call.1} parent=23 // pred_check_branch
        %490 = sbr.rel (%p488) target = $region68
      $region67: #{tpu_custom_call.1} parent=23 // pred_region
        %p491 = scmp.lt.s32.totalorder %s21, 1
        %s492 = scalar_select %p491, %s21, 1
        %s493 = scalar_lea.vmem %s12, %s492
      $region68: #{tpu_custom_call.1} parent=23 // pred_fallthru
        _
    $region24: #{tpu_custom_call.1} parent=5 // pred_fallthru
      _
    %p494 = scmp.le.s32.totalorder 1, %s21
    %p495 = scmp.lt.s32.totalorder %s21, 3
    %p496 = pnand %p494, %p495
    %p497 = pneg %p496
    // Predicated region
    $region69: #{tpu_custom_call.1} parent=5 // pred_check
      _
    $region70: #{tpu_custom_call.1} parent=5 // pred_check_branch
      %499 = sbr.rel (%p496) target = $region72
    $region71: #{tpu_custom_call.1} parent=5 // pred_region
      %s500 = ssub.s32 %s21, 1
      %p501 = pneg %p42
      %p502 = pneg %p39
      %p503 = pneg %p63
      %p504 = pneg %p60
      %p505 = scmp.lt.s32.totalorder %s26, 1
      %s506 = scalar_select %p505, %s26, 1
      %s507 = smul.addr %s506, 2
      %s508 = smul.addr %s507, 8
      %s509 = scalar_lea.vmem %s2, %s508
      %p510 = pneg %p89
      %p511 = pneg %p86
      %p512 = scmp.lt.s32.totalorder %s26, 1
      %s513 = scalar_select %p512, %s26, 1
      %s514 = smul.addr %s513, 4
      %s515 = smul.addr %s514, 8
      %s516 = scalar_lea.vmem %s3, %s515
      %p517 = pneg %p115
      %p518 = pneg %p112
      %p519 = scmp.lt.s32.totalorder %s26, 1
      %s520 = scalar_select %p519, %s26, 1
      %s521 = smul.addr %s520, 4
      %s522 = smul.addr %s521, 8
      %s523 = scalar_lea.vmem %s4, %s522
      %p524 = pneg %p141
      %p525 = pneg %p138
      %p526 = scmp.lt.s32.totalorder %s26, 1
      %s527 = scalar_select %p526, %s26, 1
      %s528 = smul.addr %s527, 8
      %s529 = scalar_lea.vmem %s5, %s528
      %p530 = pneg %p167
      %p531 = pneg %p164
      %p532 = scmp.lt.s32.totalorder %s26, 1
      %s533 = scalar_select %p532, %s26, 1
      %s534 = scalar_lea.vmem %s6, %s533
      %p535 = pneg %p193
      %p536 = pneg %p190
      %p537 = scmp.lt.s32.totalorder %s26, 1
      %s538 = scalar_select %p537, %s26, 1
      %s539 = smul.addr %s538, 8
      %s540 = scalar_lea.vmem %s7, %s539
      %p541 = pneg %p219
      %p542 = pneg %p216
      %p543 = scmp.lt.s32.totalorder %s26, 1
      %s544 = scalar_select %p543, %s26, 1
      %s545 = scalar_lea.vmem %s8, %s544
      %p546 = pneg %p245
      %p547 = pneg %p242
      %p548 = scmp.lt.s32.totalorder %s26, 1
      %s549 = scalar_select %p548, %s26, 1
      %s550 = smul.addr %s549, 4
      %s551 = smul.addr %s550, 8
      %s552 = scalar_lea.vmem %s9, %s551
      %p553 = pneg %p271
      %p554 = pneg %p268
      %p555 = scmp.lt.s32.totalorder %s26, 1
      %s556 = scalar_select %p555, %s26, 1
      %s557 = scalar_lea.vmem %s10, %s556
      %p558 = pneg %p297
      %p559 = pneg %p294
      %p560 = scmp.lt.s32.totalorder %s26, 1
      %s561 = scalar_select %p560, %s26, 1
      %s562 = smul.addr %s561, 4
      %s563 = smul.addr %s562, 8
      %s564 = scalar_lea.vmem %s11, %s563
      %p565 = pneg %p323
      %p566 = pneg %p320
      %p567 = scmp.lt.s32.totalorder %s26, 1
      %s568 = scalar_select %p567, %s26, 1
      %s569 = scalar_lea.vmem %s12, %s568
      %p570 = pneg %p349
      %p571 = pneg %p346
      %p572 = pneg %p370
      %p573 = pneg %p367
      %p574 = pneg %p391
      %p575 = pneg %p388
      %p576 = scmp.lt.s32.totalorder %s26, 1
      %s577 = scalar_select %p576, %s26, 1
      %s578 = smul.addr %s577, 2
      %s579 = smul.addr %s578, 8
      %s580 = scalar_lea.vmem %s2, %s579
      %p581 = scmp.lt.s32.totalorder %s26, 1
      %s582 = scalar_select %p581, %s26, 1
      %s583 = smul.addr %s582, 4
      %s584 = smul.addr %s583, 8
      %s585 = scalar_lea.vmem %s3, %s584
      %p586 = scmp.lt.s32.totalorder %s26, 1
      %s587 = scalar_select %p586, %s26, 1
      %s588 = smul.addr %s587, 4
      %s589 = smul.addr %s588, 8
      %s590 = scalar_lea.vmem %s4, %s589
      %p591 = scmp.lt.s32.totalorder %s26, 1
      %s592 = scalar_select %p591, %s26, 1
      %s593 = smul.addr %s592, 8
      %s594 = scalar_lea.vmem %s5, %s593
      %p595 = scmp.lt.s32.totalorder %s26, 1
      %s596 = scalar_select %p595, %s26, 1
      %s597 = scalar_lea.vmem %s6, %s596
      %p598 = scmp.lt.s32.totalorder %s26, 1
      %s599 = scalar_select %p598, %s26, 1
      %s600 = smul.addr %s599, 8
      %s601 = scalar_lea.vmem %s7, %s600
      %p602 = scmp.lt.s32.totalorder %s26, 1
      %s603 = scalar_select %p602, %s26, 1
      %s604 = scalar_lea.vmem %s8, %s603
      %p605 = scmp.lt.s32.totalorder %s26, 1
      %s606 = scalar_select %p605, %s26, 1
      %s607 = smul.addr %s606, 4
      %s608 = smul.addr %s607, 8
      %s609 = scalar_lea.vmem %s9, %s608
      %p610 = scmp.lt.s32.totalorder %s26, 1
      %s611 = scalar_select %p610, %s26, 1
      %s612 = scalar_lea.vmem %s10, %s611
      %p613 = scmp.lt.s32.totalorder %s26, 1
      %s614 = scalar_select %p613, %s26, 1
      %s615 = smul.addr %s614, 4
      %s616 = smul.addr %s615, 8
      %s617 = scalar_lea.vmem %s11, %s616
      %p618 = scmp.lt.s32.totalorder %s26, 1
      %s619 = scalar_select %p618, %s26, 1
      %s620 = scalar_lea.vmem %s12, %s619
      %p621 = scmp.eq.s32.totalorder %s26, 0
      // Predicated region
      $region73: #{tpu_custom_call.1} parent=71 // pred_check
        %p622 = pneg %p621
      $region74: #{tpu_custom_call.1} parent=71 // pred_check_branch
        %624 = sbr.rel (%p622) target = $region76
      $region75: #{tpu_custom_call.1} parent=71 // pred_region
        %v625 = vld [vmem:[%s0] sm:$0xff]
        %v626 = vld [vmem:[%s0 + $0x8] sm:$0x1]
        %v627 = vld [vmem:[%s0 + $0x10] sm:$0xff]
        %v628 = vld [vmem:[%s0 + $0x18] sm:$0x1]
        %vm629 = vcmask 64512
        %630 = vst.msk [vmem:[#allocation2] sm:$0xff] %vm629, %v625
        %vm631 = vcmask 57344
        %632 = vst.msk [vmem:[#allocation2 + $0x8] sm:$0x1] %vm631, %v626
        %633 = vst.msk [vmem:[#allocation2 + $0x10] sm:$0xff] %vm629, %v627
        %634 = vst.msk [vmem:[#allocation2 + $0x18] sm:$0x1] %vm631, %v628
        %vm635 = vcmask 1024
        %636 = vst.msk [vmem:[#allocation3] sm:$0x3] %vm635, 0.0
      $region76: #{tpu_custom_call.1} parent=71 // pred_fallthru
        _
      %v637 = vld [vmem:[#allocation2] sm:$0xff]
      %v638 = vld [vmem:[#allocation2 + $0x8] sm:$0x1]
      %s639 = scalar_lea.vmem [#allocation2], 16
      %v640 = vld [vmem:[%s639] sm:$0xff]
      %v641 = vld [vmem:[%s639 + $0x8] sm:$0x1]
      %vm642 = vcmask 64512
      %v643 = vsel %vm642, %v637, 0.0
      %644 = vadd.xlane.f32.xlu0 %v643
      %v645 = vpop.xlane.xlu0 %644
      %vm646 = vcmask 57344
      %v647 = vsel %vm646, %v638, 0.0
      %648 = vadd.xlane.f32.xlu0 %v647
      %v649 = vpop.xlane.xlu0 %648
      %v650 = vadd.f32 %v645, 0.0
      %v651 = vadd.f32 %v649, 0.0
      %v652 = vsel %vm642, %v640, 0.0
      %653 = vadd.xlane.f32.xlu0 %v652
      %v654 = vpop.xlane.xlu0 %653
      %v655 = vsel %vm646, %v641, 0.0
      %656 = vadd.xlane.f32.xlu0 %v655
      %v657 = vpop.xlane.xlu0 %656
      %v658 = vadd.f32 %v650, %v654
      %v659 = vadd.f32 %v651, %v657
      %v660 = vrcp.pop 16.0
      %v661 = vmul.f32 %v658, %v660
      %v662 = vmul.f32 %v659, %v660
      %v663 = vsub.f32 %v637, %v661
      %v664 = vsub.f32 %v638, %v662
      %v665 = vsub.f32 %v640, %v661
      %v666 = vsub.f32 %v641, %v662
      %v667 = vmul.f32 %v663, %v663
      %v668 = vmul.f32 %v664, %v664
      %v669 = vsel %vm642, %v667, 0.0
      %670 = vadd.xlane.f32.xlu0 %v669
      %v671 = vpop.xlane.xlu0 %670
      %v672 = vsel %vm646, %v668, 0.0
      %673 = vadd.xlane.f32.xlu0 %v672
      %v674 = vpop.xlane.xlu0 %673
      %v675 = vadd.f32 %v671, 0.0
      %v676 = vadd.f32 %v674, 0.0
      %v677 = vmul.f32 %v665, %v665
      %v678 = vmul.f32 %v666, %v666
      %v679 = vsel %vm642, %v677, 0.0
      %680 = vadd.xlane.f32.xlu0 %v679
      %v681 = vpop.xlane.xlu0 %680
      %v682 = vsel %vm646, %v678, 0.0
      %683 = vadd.xlane.f32.xlu0 %v682
      %v684 = vpop.xlane.xlu0 %683
      %v685 = vadd.f32 %v675, %v681
      %v686 = vadd.f32 %v676, %v684
      %v687 = vrcp.pop 15.0
      %v688 = vmul.f32 %v685, %v687
      %v689 = vmul.f32 %v686, %v687
      %v690 = vrsqrt.pop %v688
      %v691 = vmul.f32 %v688, %v690
      %vm692 = vcmp.eq.f32.partialorder %v688, inf
      %v693 = vsel %vm692, %v688, %v691
      %vm694 = vcmp.eq.f32.partialorder %v688, 0.0
      %v695 = vand.u32 %v688, 2147483648
      %v696 = vsel %vm694, %v695, %v693
      %v697 = vrsqrt.pop %v689
      %v698 = vmul.f32 %v689, %v697
      %vm699 = vcmp.eq.f32.partialorder %v689, inf
      %v700 = vsel %vm699, %v689, %v698
      %vm701 = vcmp.eq.f32.partialorder %v689, 0.0
      %v702 = vand.u32 %v689, 2147483648
      %v703 = vsel %vm701, %v702, %v700
      %v704 = vadd.f32 %v696, 1e-06
      %v705 = vadd.f32 %v703, 1e-06
      %v706 = vrcp.pop %v704
      %v707 = vmul.f32 1.0, %v706
      %v708 = vrcp.pop %v705
      %v709 = vmul.f32 1.0, %v708
      %v710 = vmul.f32 %v707, %v663
      %v711 = vmul.f32 %v709, %v664
      %v712 = vmul.f32 %v707, %v665
      %v713 = vmul.f32 %v709, %v666
      %v714 = vand.u32 2147483647, %v707
      %v715 = vand.u32 2147483647, %v709
      %v716 = vlog2.pop %v714
      %v717 = vmul.f32 %v716, 0.6931472
      %v718 = vlog2.pop %v715
      %v719 = vmul.f32 %v718, 0.6931472
      %v720 = vadd.f32 %v717, 0.0
      %v721 = vadd.f32 %v719, 0.0
      %vm722 = vcmask 1040384
      %v723 = vsel %vm722, %v721, 0.0
      %v724 = vadd.f32 %v720, %v723
      %v725 = vrot.slane %v724, 4
      %v726 = vadd.f32 %v724, %v725
      %v727 = vrot.slane %v726, 2
      %v728 = vadd.f32 %v726, %v727
      %v729 = vrot.slane %v728, 1
      %v730 = vadd.f32 %v728, %v729
      %v731 = vmul.f32 %v730, 8.0
      %v732 = vld [vmem:[%s580] sm:$0xff]
      %v733 = vld [vmem:[%s580 + $0x8] sm:$0x1]
      %v734 = vsub.f32 1.0, %v732
      %v735 = vsub.f32 1.0, %v733
      %v736 = vmul.f32 %v710, %v732
      %v737 = vmul.f32 %v711, %v733
      %v738 = vmul.f32 %v712, %v732
      %v739 = vmul.f32 %v713, %v733
      %v740 = vld [vmem:[%s594] sm:$0xff]
      %v741 = vld [vmem:[%s597] sm:$0x1]
      %v742 = vld [vmem:[%s601] sm:$0xff]
      %v743 = vld [vmem:[%s604] sm:$0x1]
      %v745 = vlaneseq
      %v746 = vshrl.u32 %v745, 7
      %v747 = vsub.s32 0, %v746
      %v748 = vrot.slane %v741, %v747
      %v751 = vsel %vm642, %v736, 0
      %v754 = vsel %vm642, %v737, 0
      %756 = vmatprep.subr.mxu0 0.0
      %757 = vmatpush1.msra.mxu0 0.0
      %758 = vmatprep.subr.mxu0 0.0
      %759 = vmatpush1.msra.mxu0 0.0
      %760 = vmatprep.subr.mxu0 0.0
      %761 = vmatpush1.msra.mxu0 0.0
      %762 = vmatprep.subr.mxu0 0.0
      %763 = vmatpush1.msra.mxu0 0.0
      %764 = vmatprep.subr.mxu0 0.0
      %765 = vmatpush1.msra.mxu0 0.0
      %766 = vmatprep.subr.mxu0 0.0
      %767 = vmatpush1.msra.mxu0 0.0
      %768 = vmatprep.subr.mxu0 0.0
      %769 = vmatpush1.msra.mxu0 0.0
      %770 = vmatprep.subr.mxu0 0.0
      %771 = vmatpush1.msra.mxu0 0.0
      %772 = vmatprep.subr.mxu0 0.0
      %773 = vmatpush1.msra.mxu0 0.0
      %774 = vmatprep.subr.mxu0 0.0
      %775 = vmatpush1.msra.mxu0 0.0
      %776 = vmatprep.subr.mxu0 0.0
      %777 = vmatpush1.msra.mxu0 0.0
      %778 = vmatprep.subr.mxu0 0.0
      %779 = vmatpush1.msra.mxu0 0.0
      %780 = vmatprep.subr.mxu0 0.0
      %781 = vmatpush1.msra.mxu0 0.0
      %782 = vmatprep.subr.mxu0 0.0
      %783 = vmatpush1.msra.mxu0 0.0
      %784 = vmatprep.subr.mxu0 0.0
      %785 = vmatpush1.msra.mxu0 0.0
      %786 = vmatprep.subr.mxu0 0.0
      %787 = vmatpush1.msra.mxu0 %v740
      %788 = vmatprep.subr.mxu0 0.0
      %789 = vmatpush2.msra.mxu0 0.0
      %790 = vmatprep.subr.mxu0 0.0
      %791 = vmatpush2.msra.mxu0 0.0
      %792 = vmatprep.subr.mxu0 0.0
      %793 = vmatpush2.msra.mxu0 0.0
      %794 = vmatprep.subr.mxu0 0.0
      %795 = vmatpush2.msra.mxu0 0.0
      %796 = vmatprep.subr.mxu0 0.0
      %797 = vmatpush2.msra.mxu0 0.0
      %798 = vmatprep.subr.mxu0 0.0
      %799 = vmatpush2.msra.mxu0 0.0
      %800 = vmatprep.subr.mxu0 0.0
      %801 = vmatpush2.msra.mxu0 0.0
      %802 = vmatprep.subr.mxu0 0.0
      %803 = vmatpush2.msra.mxu0 0.0
      %804 = vmatprep.subr.mxu0 0.0
      %805 = vmatpush2.msra.mxu0 0.0
      %806 = vmatprep.subr.mxu0 0.0
      %807 = vmatpush2.msra.mxu0 0.0
      %808 = vmatprep.subr.mxu0 0.0
      %809 = vmatpush2.msra.mxu0 0.0
      %810 = vmatprep.subr.mxu0 0.0
      %811 = vmatpush2.msra.mxu0 0.0
      %812 = vmatprep.subr.mxu0 0.0
      %813 = vmatpush2.msra.mxu0 0.0
      %814 = vmatprep.subr.mxu0 0.0
      %815 = vmatpush2.msra.mxu0 0.0
      %816 = vmatprep.subr.mxu0 0.0
      %817 = vmatpush2.msra.mxu0 0.0
      %818 = vmatprep.subr.mxu0 0.0
      %819 = vmatpush2.msra.mxu0 0.0
      %820 = vmatprep.mubr.f32.mxu0 0.0
      %821 = vmatmul.mubr.f32.gmra.mxu0 %v751
      %v822 = vpop.f32.mrf.mxu0
      %v823 = vadd.f32 %v748, %v822
      %v824 = vpop.f32.mrf.mxu0
      %825 = vmatprep.mubr.f32.mxu0 0.0
      %826 = vmatmul.mubr.f32.gmra.mxu0 %v754
      %v827 = vpop.f32.mrf.mxu0
      %v828 = vadd.f32 %v748, %v827
      %v829 = vpop.f32.mrf.mxu0
      %830 = vdwg.mxu0
      %v832 = vlaneseq
      %v833 = vshrl.u32 %v832, 7
      %v834 = vsub.s32 0, %v833
      %v835 = vrot.slane %v743, %v834
      %837 = vmatprep.subr.mxu0 0.0
      %838 = vmatpush1.msra.mxu0 0.0
      %839 = vmatprep.subr.mxu0 0.0
      %840 = vmatpush1.msra.mxu0 0.0
      %841 = vmatprep.subr.mxu0 0.0
      %842 = vmatpush1.msra.mxu0 0.0
      %843 = vmatprep.subr.mxu0 0.0
      %844 = vmatpush1.msra.mxu0 0.0
      %845 = vmatprep.subr.mxu0 0.0
      %846 = vmatpush1.msra.mxu0 0.0
      %847 = vmatprep.subr.mxu0 0.0
      %848 = vmatpush1.msra.mxu0 0.0
      %849 = vmatprep.subr.mxu0 0.0
      %850 = vmatpush1.msra.mxu0 0.0
      %851 = vmatprep.subr.mxu0 0.0
      %852 = vmatpush1.msra.mxu0 0.0
      %853 = vmatprep.subr.mxu0 0.0
      %854 = vmatpush1.msra.mxu0 0.0
      %855 = vmatprep.subr.mxu0 0.0
      %856 = vmatpush1.msra.mxu0 0.0
      %857 = vmatprep.subr.mxu0 0.0
      %858 = vmatpush1.msra.mxu0 0.0
      %859 = vmatprep.subr.mxu0 0.0
      %860 = vmatpush1.msra.mxu0 0.0
      %861 = vmatprep.subr.mxu0 0.0
      %862 = vmatpush1.msra.mxu0 0.0
      %863 = vmatprep.subr.mxu0 0.0
      %864 = vmatpush1.msra.mxu0 0.0
      %865 = vmatprep.subr.mxu0 0.0
      %866 = vmatpush1.msra.mxu0 0.0
      %867 = vmatprep.subr.mxu0 0.0
      %868 = vmatpush1.msra.mxu0 %v742
      %869 = vmatprep.subr.mxu0 0.0
      %870 = vmatpush2.msra.mxu0 0.0
      %871 = vmatprep.subr.mxu0 0.0
      %872 = vmatpush2.msra.mxu0 0.0
      %873 = vmatprep.subr.mxu0 0.0
      %874 = vmatpush2.msra.mxu0 0.0
      %875 = vmatprep.subr.mxu0 0.0
      %876 = vmatpush2.msra.mxu0 0.0
      %877 = vmatprep.subr.mxu0 0.0
      %878 = vmatpush2.msra.mxu0 0.0
      %879 = vmatprep.subr.mxu0 0.0
      %880 = vmatpush2.msra.mxu0 0.0
      %881 = vmatprep.subr.mxu0 0.0
      %882 = vmatpush2.msra.mxu0 0.0
      %883 = vmatprep.subr.mxu0 0.0
      %884 = vmatpush2.msra.mxu0 0.0
      %885 = vmatprep.subr.mxu0 0.0
      %886 = vmatpush2.msra.mxu0 0.0
      %887 = vmatprep.subr.mxu0 0.0
      %888 = vmatpush2.msra.mxu0 0.0
      %889 = vmatprep.subr.mxu0 0.0
      %890 = vmatpush2.msra.mxu0 0.0
      %891 = vmatprep.subr.mxu0 0.0
      %892 = vmatpush2.msra.mxu0 0.0
      %893 = vmatprep.subr.mxu0 0.0
      %894 = vmatpush2.msra.mxu0 0.0
      %895 = vmatprep.subr.mxu0 0.0
      %896 = vmatpush2.msra.mxu0 0.0
      %897 = vmatprep.subr.mxu0 0.0
      %898 = vmatpush2.msra.mxu0 0.0
      %899 = vmatprep.subr.mxu0 0.0
      %900 = vmatpush2.msra.mxu0 0.0
      %901 = vmatprep.mubr.f32.mxu0 0.0
      %902 = vmatmul.mubr.f32.gmra.mxu0 %v751
      %v903 = vpop.f32.mrf.mxu0
      %v904 = vadd.f32 %v835, %v903
      %v905 = vpop.f32.mrf.mxu0
      %906 = vmatprep.mubr.f32.mxu0 0.0
      %907 = vmatmul.mubr.f32.gmra.mxu0 %v754
      %v908 = vpop.f32.mrf.mxu0
      %v909 = vadd.f32 %v835, %v908
      %v910 = vpop.f32.mrf.mxu0
      %911 = vdwg.mxu0
      %v914 = vrot.slane %v904, 7
      %v915 = vrot.slane %v909, 7
      %v916 = vsel %vm722, %v914, %v915
      %917 = vrot.lane.b32.xlu0 %v914, 96
      %v918 = vpop.permute.xlu0 %917
      %919 = vrot.lane.b32.xlu0 %v916, 96
      %v920 = vpop.permute.xlu0 %919
      %vm923 = vcmask 1041408
      %v924 = vrot.slane %v904, 6
      %v925 = vrot.slane %v909, 6
      %v926 = vsel %vm923, %v924, %v925
      %927 = vrot.lane.b32.xlu0 %v924, 64
      %v928 = vpop.permute.xlu0 %927
      %929 = vrot.lane.b32.xlu0 %v926, 64
      %v930 = vpop.permute.xlu0 %929
      %vm933 = vcmask 1042432
      %v934 = vrot.slane %v904, 5
      %v935 = vrot.slane %v909, 5
      %v936 = vsel %vm933, %v934, %v935
      %937 = vrot.lane.b32.xlu0 %v934, 32
      %v938 = vpop.permute.xlu0 %937
      %939 = vrot.lane.b32.xlu0 %v936, 32
      %v940 = vpop.permute.xlu0 %939
      %v942 = vsel %vm722, %v909, %v918
      %v943 = vsel %vm923, %v920, %v928
      %v944 = vsel %vm933, %v930, %v938
      %v945 = vld [vmem:[%s1] sm:$0xff]
      %v946 = vld [vmem:[%s1 + $0x8] sm:$0x1]
      %vm947 = vcmask 293888
      %v949 = vsel %vm947, %v945, 0
      %v952 = vsel %vm947, %v946, 0
      %vm954 = vcmask 1043456
      %v955 = vsel %vm954, %v940, 0
      %957 = vmatprep.subr.mxu0 0.0
      %958 = vmatpush1.msra.mxu0 0.0
      %959 = vmatprep.subr.mxu0 0.0
      %960 = vmatpush1.msra.mxu0 0.0
      %961 = vmatprep.subr.mxu0 0.0
      %962 = vmatpush1.msra.mxu0 0.0
      %963 = vmatprep.subr.mxu0 0.0
      %964 = vmatpush1.msra.mxu0 0.0
      %965 = vmatprep.subr.mxu0 0.0
      %966 = vmatpush1.msra.mxu0 0.0
      %967 = vmatprep.subr.mxu0 0.0
      %968 = vmatpush1.msra.mxu0 0.0
      %969 = vmatprep.subr.mxu0 0.0
      %970 = vmatpush1.msra.mxu0 0.0
      %971 = vmatprep.subr.mxu0 0.0
      %972 = vmatpush1.msra.mxu0 0.0
      %973 = vmatprep.subr.mxu0 0.0
      %974 = vmatpush1.msra.mxu0 0.0
      %975 = vmatprep.subr.mxu0 0.0
      %976 = vmatpush1.msra.mxu0 0.0
      %977 = vmatprep.subr.mxu0 0.0
      %978 = vmatpush1.msra.mxu0 0.0
      %979 = vmatprep.subr.mxu0 0.0
      %980 = vmatpush1.msra.mxu0 %v955
      %981 = vmatprep.subr.mxu0 0.0
      %982 = vmatpush1.msra.mxu0 %v944
      %983 = vmatprep.subr.mxu0 0.0
      %984 = vmatpush1.msra.mxu0 %v943
      %985 = vmatprep.subr.mxu0 0.0
      %986 = vmatpush1.msra.mxu0 %v942
      %987 = vmatprep.subr.mxu0 0.0
      %988 = vmatpush1.msra.mxu0 %v904
      %989 = vmatprep.subr.mxu0 0.0
      %990 = vmatpush2.msra.mxu0 0.0
      %991 = vmatprep.subr.mxu0 0.0
      %992 = vmatpush2.msra.mxu0 0.0
      %993 = vmatprep.subr.mxu0 0.0
      %994 = vmatpush2.msra.mxu0 0.0
      %995 = vmatprep.subr.mxu0 0.0
      %996 = vmatpush2.msra.mxu0 0.0
      %997 = vmatprep.subr.mxu0 0.0
      %998 = vmatpush2.msra.mxu0 0.0
      %999 = vmatprep.subr.mxu0 0.0
      %1000 = vmatpush2.msra.mxu0 0.0
      %1001 = vmatprep.subr.mxu0 0.0
      %1002 = vmatpush2.msra.mxu0 0.0
      %1003 = vmatprep.subr.mxu0 0.0
      %1004 = vmatpush2.msra.mxu0 0.0
      %1005 = vmatprep.subr.mxu0 0.0
      %1006 = vmatpush2.msra.mxu0 0.0
      %1007 = vmatprep.subr.mxu0 0.0
      %1008 = vmatpush2.msra.mxu0 0.0
      %1009 = vmatprep.subr.mxu0 0.0
      %1010 = vmatpush2.msra.mxu0 0.0
      %1011 = vmatprep.subr.mxu0 0.0
      %1012 = vmatpush2.msra.mxu0 0.0
      %1013 = vmatprep.subr.mxu0 0.0
      %1014 = vmatpush2.msra.mxu0 0.0
      %1015 = vmatprep.subr.mxu0 0.0
      %1016 = vmatpush2.msra.mxu0 0.0
      %1017 = vmatprep.subr.mxu0 0.0
      %1018 = vmatpush2.msra.mxu0 0.0
      %1019 = vmatprep.subr.mxu0 0.0
      %1020 = vmatpush2.msra.mxu0 0.0
      %1021 = vmatprep.mubr.f32.mxu0 0.0
      %1022 = vmatmul.mubr.f32.gmra.mxu0 %v949
      %v1023 = vpop.f32.mrf.mxu0
      %v1024 = vadd.f32 0.0, %v1023
      %v1025 = vpop.f32.mrf.mxu0
      %1026 = vmatprep.mubr.f32.mxu0 0.0
      %1027 = vmatmul.mubr.f32.gmra.mxu0 %v952
      %v1028 = vpop.f32.mrf.mxu0
      %v1029 = vadd.f32 0.0, %v1028
      %v1030 = vpop.f32.mrf.mxu0
      %1031 = vdwg.mxu0
      %v1032 = vadd.f32 %v823, %v1024
      %v1033 = vadd.f32 %v828, %v1029
      %v1035 = vsel %vm642, %v738, 0
      %v1038 = vsel %vm642, %v739, 0
      %1040 = vmatprep.subr.mxu0 0.0
      %1041 = vmatpush1.msra.mxu0 0.0
      %1042 = vmatprep.subr.mxu0 0.0
      %1043 = vmatpush1.msra.mxu0 0.0
      %1044 = vmatprep.subr.mxu0 0.0
      %1045 = vmatpush1.msra.mxu0 0.0
      %1046 = vmatprep.subr.mxu0 0.0
      %1047 = vmatpush1.msra.mxu0 0.0
      %1048 = vmatprep.subr.mxu0 0.0
      %1049 = vmatpush1.msra.mxu0 0.0
      %1050 = vmatprep.subr.mxu0 0.0
      %1051 = vmatpush1.msra.mxu0 0.0
      %1052 = vmatprep.subr.mxu0 0.0
      %1053 = vmatpush1.msra.mxu0 0.0
      %1054 = vmatprep.subr.mxu0 0.0
      %1055 = vmatpush1.msra.mxu0 0.0
      %1056 = vmatprep.subr.mxu0 0.0
      %1057 = vmatpush1.msra.mxu0 0.0
      %1058 = vmatprep.subr.mxu0 0.0
      %1059 = vmatpush1.msra.mxu0 0.0
      %1060 = vmatprep.subr.mxu0 0.0
      %1061 = vmatpush1.msra.mxu0 0.0
      %1062 = vmatprep.subr.mxu0 0.0
      %1063 = vmatpush1.msra.mxu0 0.0
      %1064 = vmatprep.subr.mxu0 0.0
      %1065 = vmatpush1.msra.mxu0 0.0
      %1066 = vmatprep.subr.mxu0 0.0
      %1067 = vmatpush1.msra.mxu0 0.0
      %1068 = vmatprep.subr.mxu0 0.0
      %1069 = vmatpush1.msra.mxu0 0.0
      %1070 = vmatprep.subr.mxu0 0.0
      %1071 = vmatpush1.msra.mxu0 %v740
      %1072 = vmatprep.subr.mxu0 0.0
      %1073 = vmatpush2.msra.mxu0 0.0
      %1074 = vmatprep.subr.mxu0 0.0
      %1075 = vmatpush2.msra.mxu0 0.0
      %1076 = vmatprep.subr.mxu0 0.0
      %1077 = vmatpush2.msra.mxu0 0.0
      %1078 = vmatprep.subr.mxu0 0.0
      %1079 = vmatpush2.msra.mxu0 0.0
      %1080 = vmatprep.subr.mxu0 0.0
      %1081 = vmatpush2.msra.mxu0 0.0
      %1082 = vmatprep.subr.mxu0 0.0
      %1083 = vmatpush2.msra.mxu0 0.0
      %1084 = vmatprep.subr.mxu0 0.0
      %1085 = vmatpush2.msra.mxu0 0.0
      %1086 = vmatprep.subr.mxu0 0.0
      %1087 = vmatpush2.msra.mxu0 0.0
      %1088 = vmatprep.subr.mxu0 0.0
      %1089 = vmatpush2.msra.mxu0 0.0
      %1090 = vmatprep.subr.mxu0 0.0
      %1091 = vmatpush2.msra.mxu0 0.0
      %1092 = vmatprep.subr.mxu0 0.0
      %1093 = vmatpush2.msra.mxu0 0.0
      %1094 = vmatprep.subr.mxu0 0.0
      %1095 = vmatpush2.msra.mxu0 0.0
      %1096 = vmatprep.subr.mxu0 0.0
      %1097 = vmatpush2.msra.mxu0 0.0
      %1098 = vmatprep.subr.mxu0 0.0
      %1099 = vmatpush2.msra.mxu0 0.0
      %1100 = vmatprep.subr.mxu0 0.0
      %1101 = vmatpush2.msra.mxu0 0.0
      %1102 = vmatprep.subr.mxu0 0.0
      %1103 = vmatpush2.msra.mxu0 0.0
      %1104 = vmatprep.mubr.f32.mxu0 0.0
      %1105 = vmatmul.mubr.f32.gmra.mxu0 %v1035
      %v1106 = vpop.f32.mrf.mxu0
      %v1107 = vadd.f32 %v748, %v1106
      %v1108 = vpop.f32.mrf.mxu0
      %1109 = vmatprep.mubr.f32.mxu0 0.0
      %1110 = vmatmul.mubr.f32.gmra.mxu0 %v1038
      %v1111 = vpop.f32.mrf.mxu0
      %v1112 = vadd.f32 %v748, %v1111
      %v1113 = vpop.f32.mrf.mxu0
      %1114 = vdwg.mxu0
      %1115 = vmatprep.subr.mxu0 0.0
      %1116 = vmatpush1.msra.mxu0 0.0
      %1117 = vmatprep.subr.mxu0 0.0
      %1118 = vmatpush1.msra.mxu0 0.0
      %1119 = vmatprep.subr.mxu0 0.0
      %1120 = vmatpush1.msra.mxu0 0.0
      %1121 = vmatprep.subr.mxu0 0.0
      %1122 = vmatpush1.msra.mxu0 0.0
      %1123 = vmatprep.subr.mxu0 0.0
      %1124 = vmatpush1.msra.mxu0 0.0
      %1125 = vmatprep.subr.mxu0 0.0
      %1126 = vmatpush1.msra.mxu0 0.0
      %1127 = vmatprep.subr.mxu0 0.0
      %1128 = vmatpush1.msra.mxu0 0.0
      %1129 = vmatprep.subr.mxu0 0.0
      %1130 = vmatpush1.msra.mxu0 0.0
      %1131 = vmatprep.subr.mxu0 0.0
      %1132 = vmatpush1.msra.mxu0 0.0
      %1133 = vmatprep.subr.mxu0 0.0
      %1134 = vmatpush1.msra.mxu0 0.0
      %1135 = vmatprep.subr.mxu0 0.0
      %1136 = vmatpush1.msra.mxu0 0.0
      %1137 = vmatprep.subr.mxu0 0.0
      %1138 = vmatpush1.msra.mxu0 0.0
      %1139 = vmatprep.subr.mxu0 0.0
      %1140 = vmatpush1.msra.mxu0 0.0
      %1141 = vmatprep.subr.mxu0 0.0
      %1142 = vmatpush1.msra.mxu0 0.0
      %1143 = vmatprep.subr.mxu0 0.0
      %1144 = vmatpush1.msra.mxu0 0.0
      %1145 = vmatprep.subr.mxu0 0.0
      %1146 = vmatpush1.msra.mxu0 %v742
      %1147 = vmatprep.subr.mxu0 0.0
      %1148 = vmatpush2.msra.mxu0 0.0
      %1149 = vmatprep.subr.mxu0 0.0
      %1150 = vmatpush2.msra.mxu0 0.0
      %1151 = vmatprep.subr.mxu0 0.0
      %1152 = vmatpush2.msra.mxu0 0.0
      %1153 = vmatprep.subr.mxu0 0.0
      %1154 = vmatpush2.msra.mxu0 0.0
      %1155 = vmatprep.subr.mxu0 0.0
      %1156 = vmatpush2.msra.mxu0 0.0
      %1157 = vmatprep.subr.mxu0 0.0
      %1158 = vmatpush2.msra.mxu0 0.0
      %1159 = vmatprep.subr.mxu0 0.0
      %1160 = vmatpush2.msra.mxu0 0.0
      %1161 = vmatprep.subr.mxu0 0.0
      %1162 = vmatpush2.msra.mxu0 0.0
      %1163 = vmatprep.subr.mxu0 0.0
      %1164 = vmatpush2.msra.mxu0 0.0
      %1165 = vmatprep.subr.mxu0 0.0
      %1166 = vmatpush2.msra.mxu0 0.0
      %1167 = vmatprep.subr.mxu0 0.0
      %1168 = vmatpush2.msra.mxu0 0.0
      %1169 = vmatprep.subr.mxu0 0.0
      %1170 = vmatpush2.msra.mxu0 0.0
      %1171 = vmatprep.subr.mxu0 0.0
      %1172 = vmatpush2.msra.mxu0 0.0
      %1173 = vmatprep.subr.mxu0 0.0
      %1174 = vmatpush2.msra.mxu0 0.0
      %1175 = vmatprep.subr.mxu0 0.0
      %1176 = vmatpush2.msra.mxu0 0.0
      %1177 = vmatprep.subr.mxu0 0.0
      %1178 = vmatpush2.msra.mxu0 0.0
      %1179 = vmatprep.mubr.f32.mxu0 0.0
      %1180 = vmatmul.mubr.f32.gmra.mxu0 %v1035
      %v1181 = vpop.f32.mrf.mxu0
      %v1182 = vadd.f32 %v835, %v1181
      %v1183 = vpop.f32.mrf.mxu0
      %1184 = vmatprep.mubr.f32.mxu0 0.0
      %1185 = vmatmul.mubr.f32.gmra.mxu0 %v1038
      %v1186 = vpop.f32.mrf.mxu0
      %v1187 = vadd.f32 %v835, %v1186
      %v1188 = vpop.f32.mrf.mxu0
      %1189 = vdwg.mxu0
      %v1192 = vrot.slane %v1182, 7
      %v1193 = vrot.slane %v1187, 7
      %v1194 = vsel %vm722, %v1192, %v1193
      %1195 = vrot.lane.b32.xlu0 %v1192, 96
      %v1196 = vpop.permute.xlu0 %1195
      %1197 = vrot.lane.b32.xlu0 %v1194, 96
      %v1198 = vpop.permute.xlu0 %1197
      %v1201 = vrot.slane %v1182, 6
      %v1202 = vrot.slane %v1187, 6
      %v1203 = vsel %vm923, %v1201, %v1202
      %1204 = vrot.lane.b32.xlu0 %v1201, 64
      %v1205 = vpop.permute.xlu0 %1204
      %1206 = vrot.lane.b32.xlu0 %v1203, 64
      %v1207 = vpop.permute.xlu0 %1206
      %v1210 = vrot.slane %v1182, 5
      %v1211 = vrot.slane %v1187, 5
      %v1212 = vsel %vm933, %v1210, %v1211
      %1213 = vrot.lane.b32.xlu0 %v1210, 32
      %v1214 = vpop.permute.xlu0 %1213
      %1215 = vrot.lane.b32.xlu0 %v1212, 32
      %v1216 = vpop.permute.xlu0 %1215
      %v1218 = vsel %vm722, %v1187, %v1196
      %v1219 = vsel %vm923, %v1198, %v1205
      %v1220 = vsel %vm933, %v1207, %v1214
      %s1221 = scalar_lea.vmem %s1, 16
      %v1222 = vld [vmem:[%s1221] sm:$0xff]
      %v1223 = vld [vmem:[%s1221 + $0x8] sm:$0x1]
      %v1225 = vsel %vm947, %v1222, 0
      %v1228 = vsel %vm947, %v1223, 0
      %v1230 = vsel %vm954, %v1216, 0
      %1232 = vmatprep.subr.mxu0 0.0
      %1233 = vmatpush1.msra.mxu0 0.0
      %1234 = vmatprep.subr.mxu0 0.0
      %1235 = vmatpush1.msra.mxu0 0.0
      %1236 = vmatprep.subr.mxu0 0.0
      %1237 = vmatpush1.msra.mxu0 0.0
      %1238 = vmatprep.subr.mxu0 0.0
      %1239 = vmatpush1.msra.mxu0 0.0
      %1240 = vmatprep.subr.mxu0 0.0
      %1241 = vmatpush1.msra.mxu0 0.0
      %1242 = vmatprep.subr.mxu0 0.0
      %1243 = vmatpush1.msra.mxu0 0.0
      %1244 = vmatprep.subr.mxu0 0.0
      %1245 = vmatpush1.msra.mxu0 0.0
      %1246 = vmatprep.subr.mxu0 0.0
      %1247 = vmatpush1.msra.mxu0 0.0
      %1248 = vmatprep.subr.mxu0 0.0
      %1249 = vmatpush1.msra.mxu0 0.0
      %1250 = vmatprep.subr.mxu0 0.0
      %1251 = vmatpush1.msra.mxu0 0.0
      %1252 = vmatprep.subr.mxu0 0.0
      %1253 = vmatpush1.msra.mxu0 0.0
      %1254 = vmatprep.subr.mxu0 0.0
      %1255 = vmatpush1.msra.mxu0 %v1230
      %1256 = vmatprep.subr.mxu0 0.0
      %1257 = vmatpush1.msra.mxu0 %v1220
      %1258 = vmatprep.subr.mxu0 0.0
      %1259 = vmatpush1.msra.mxu0 %v1219
      %1260 = vmatprep.subr.mxu0 0.0
      %1261 = vmatpush1.msra.mxu0 %v1218
      %1262 = vmatprep.subr.mxu0 0.0
      %1263 = vmatpush1.msra.mxu0 %v1182
      %1264 = vmatprep.subr.mxu0 0.0
      %1265 = vmatpush2.msra.mxu0 0.0
      %1266 = vmatprep.subr.mxu0 0.0
      %1267 = vmatpush2.msra.mxu0 0.0
      %1268 = vmatprep.subr.mxu0 0.0
      %1269 = vmatpush2.msra.mxu0 0.0
      %1270 = vmatprep.subr.mxu0 0.0
      %1271 = vmatpush2.msra.mxu0 0.0
      %1272 = vmatprep.subr.mxu0 0.0
      %1273 = vmatpush2.msra.mxu0 0.0
      %1274 = vmatprep.subr.mxu0 0.0
      %1275 = vmatpush2.msra.mxu0 0.0
      %1276 = vmatprep.subr.mxu0 0.0
      %1277 = vmatpush2.msra.mxu0 0.0
      %1278 = vmatprep.subr.mxu0 0.0
      %1279 = vmatpush2.msra.mxu0 0.0
      %1280 = vmatprep.subr.mxu0 0.0
      %1281 = vmatpush2.msra.mxu0 0.0
      %1282 = vmatprep.subr.mxu0 0.0
      %1283 = vmatpush2.msra.mxu0 0.0
      %1284 = vmatprep.subr.mxu0 0.0
      %1285 = vmatpush2.msra.mxu0 0.0
      %1286 = vmatprep.subr.mxu0 0.0
      %1287 = vmatpush2.msra.mxu0 0.0
      %1288 = vmatprep.subr.mxu0 0.0
      %1289 = vmatpush2.msra.mxu0 0.0
      %1290 = vmatprep.subr.mxu0 0.0
      %1291 = vmatpush2.msra.mxu0 0.0
      %1292 = vmatprep.subr.mxu0 0.0
      %1293 = vmatpush2.msra.mxu0 0.0
      %1294 = vmatprep.subr.mxu0 0.0
      %1295 = vmatpush2.msra.mxu0 0.0
      %1296 = vmatprep.mubr.f32.mxu0 0.0
      %1297 = vmatmul.mubr.f32.gmra.mxu0 %v1225
      %v1298 = vpop.f32.mrf.mxu0
      %v1299 = vadd.f32 0.0, %v1298
      %v1300 = vpop.f32.mrf.mxu0
      %1301 = vmatprep.mubr.f32.mxu0 0.0
      %1302 = vmatmul.mubr.f32.gmra.mxu0 %v1228
      %v1303 = vpop.f32.mrf.mxu0
      %v1304 = vadd.f32 0.0, %v1303
      %v1305 = vpop.f32.mrf.mxu0
      %1306 = vdwg.mxu0
      %v1307 = vadd.f32 %v1107, %v1299
      %v1308 = vadd.f32 %v1112, %v1304
      %vm1309 = vcmask 261120
      %v1310 = vsel %vm1309, %v1032, 0.0
      %1311 = vadd.xlane.f32.xlu0 %v1310
      %v1312 = vpop.xlane.xlu0 %1311
      %vm1313 = vcmask 253952
      %v1314 = vsel %vm1313, %v1033, 0.0
      %1315 = vadd.xlane.f32.xlu0 %v1314
      %v1316 = vpop.xlane.xlu0 %1315
      %v1317 = vadd.f32 %v1312, 0.0
      %v1318 = vadd.f32 %v1316, 0.0
      %v1319 = vsel %vm1309, %v1307, 0.0
      %1320 = vadd.xlane.f32.xlu0 %v1319
      %v1321 = vpop.xlane.xlu0 %1320
      %v1322 = vsel %vm1313, %v1308, 0.0
      %1323 = vadd.xlane.f32.xlu0 %v1322
      %v1324 = vpop.xlane.xlu0 %1323
      %v1325 = vadd.f32 %v1317, %v1321
      %v1326 = vadd.f32 %v1318, %v1324
      %v1327 = vrcp.pop 64.0
      %v1328 = vmul.f32 %v1325, %v1327
      %v1329 = vmul.f32 %v1326, %v1327
      %v1330 = vsub.f32 %v1032, %v1328
      %v1331 = vsub.f32 %v1033, %v1329
      %v1332 = vsub.f32 %v1307, %v1328
      %v1333 = vsub.f32 %v1308, %v1329
      %v1334 = vmul.f32 %v1330, %v1330
      %v1335 = vmul.f32 %v1331, %v1331
      %v1336 = vsel %vm1309, %v1334, 0.0
      %1337 = vadd.xlane.f32.xlu0 %v1336
      %v1338 = vpop.xlane.xlu0 %1337
      %v1339 = vsel %vm1313, %v1335, 0.0
      %1340 = vadd.xlane.f32.xlu0 %v1339
      %v1341 = vpop.xlane.xlu0 %1340
      %v1342 = vadd.f32 %v1338, 0.0
      %v1343 = vadd.f32 %v1341, 0.0
      %v1344 = vmul.f32 %v1332, %v1332
      %v1345 = vmul.f32 %v1333, %v1333
      %v1346 = vsel %vm1309, %v1344, 0.0
      %1347 = vadd.xlane.f32.xlu0 %v1346
      %v1348 = vpop.xlane.xlu0 %1347
      %v1349 = vsel %vm1313, %v1345, 0.0
      %1350 = vadd.xlane.f32.xlu0 %v1349
      %v1351 = vpop.xlane.xlu0 %1350
      %v1352 = vadd.f32 %v1342, %v1348
      %v1353 = vadd.f32 %v1343, %v1351
      %v1354 = vmul.f32 %v1352, %v1327
      %v1355 = vmul.f32 %v1353, %v1327
      %v1356 = vadd.f32 %v1354, 1e-05
      %v1357 = vadd.f32 %v1355, 1e-05
      %v1358 = vrsqrt.pop %v1356
      %v1359 = vrsqrt.pop %v1357
      %v1360 = vld [vmem:[%s585] sm:$0xff]
      %v1361 = vld [vmem:[%s585 + $0x8] sm:$0x1]
      %v1362 = vld [vmem:[%s590] sm:$0xff]
      %v1363 = vld [vmem:[%s590 + $0x8] sm:$0x1]
      %v1364 = vmul.f32 %v1330, %v1358
      %v1365 = vmul.f32 %v1331, %v1359
      %1367 = vset.pattern.permute.xlu0 0
      %1368 = vperm.xlu0 %1367, %v1360
      %v1369 = vpop.permute.xlu0 %1368
      %1372 = vset.pattern.permute.xlu0 0
      %1373 = vperm.xlu0 %1372, %v1361
      %v1374 = vpop.permute.xlu0 %1373
      %v1376 = vmul.f32 %v1364, %v1369
      %v1377 = vmul.f32 %v1365, %v1374
      %1379 = vset.pattern.permute.xlu0 0
      %1380 = vperm.xlu0 %1379, %v1362
      %v1381 = vpop.permute.xlu0 %1380
      %1384 = vset.pattern.permute.xlu0 0
      %1385 = vperm.xlu0 %1384, %v1363
      %v1386 = vpop.permute.xlu0 %1385
      %v1388 = vadd.f32 %v1376, %v1381
      %v1389 = vadd.f32 %v1377, %v1386
      %v1390 = vmax.f32 %v1388, 0.0
      %v1391 = vmax.f32 %v1389, 0.0
      %v1392 = vmul.f32 %v1332, %v1358
      %v1393 = vmul.f32 %v1333, %v1359
      %v1394 = vmul.f32 %v1392, %v1369
      %v1395 = vmul.f32 %v1393, %v1374
      %v1396 = vadd.f32 %v1394, %v1381
      %v1397 = vadd.f32 %v1395, %v1386
      %v1398 = vmax.f32 %v1396, 0.0
      %v1399 = vmax.f32 %v1397, 0.0
      %v1400 = vld [vmem:[%s609] sm:$0xff]
      %v1401 = vld [vmem:[%s609 + $0x8] sm:$0xff]
      %v1402 = vld [vmem:[%s609 + $0x10] sm:$0xff]
      %v1403 = vld [vmem:[%s609 + $0x18] sm:$0xff]
      %v1404 = vld [vmem:[%s612] sm:$0x1]
      %v1406 = vlaneseq
      %v1407 = vshrl.u32 %v1406, 7
      %v1408 = vsub.s32 0, %v1407
      %v1409 = vrot.slane %v1404, %v1408
      %v1412 = vsel %vm1309, %v1390, 0
      %v1415 = vsel %vm1309, %v1391, 0
      %1417 = vmatprep.subr.mxu0 0.0
      %1418 = vmatpush1.msra.mxu0 0.0
      %1419 = vmatprep.subr.mxu0 0.0
      %1420 = vmatpush1.msra.mxu0 0.0
      %1421 = vmatprep.subr.mxu0 0.0
      %1422 = vmatpush1.msra.mxu0 0.0
      %1423 = vmatprep.subr.mxu0 0.0
      %1424 = vmatpush1.msra.mxu0 0.0
      %1425 = vmatprep.subr.mxu0 0.0
      %1426 = vmatpush1.msra.mxu0 0.0
      %1427 = vmatprep.subr.mxu0 0.0
      %1428 = vmatpush1.msra.mxu0 0.0
      %1429 = vmatprep.subr.mxu0 0.0
      %1430 = vmatpush1.msra.mxu0 0.0
      %1431 = vmatprep.subr.mxu0 0.0
      %1432 = vmatpush1.msra.mxu0 0.0
      %1433 = vmatprep.subr.mxu0 0.0
      %1434 = vmatpush1.msra.mxu0 0.0
      %1435 = vmatprep.subr.mxu0 0.0
      %1436 = vmatpush1.msra.mxu0 0.0
      %1437 = vmatprep.subr.mxu0 0.0
      %1438 = vmatpush1.msra.mxu0 0.0
      %1439 = vmatprep.subr.mxu0 0.0
      %1440 = vmatpush1.msra.mxu0 0.0
      %1441 = vmatprep.subr.mxu0 0.0
      %1442 = vmatpush1.msra.mxu0 %v1403
      %1443 = vmatprep.subr.mxu0 0.0
      %1444 = vmatpush1.msra.mxu0 %v1402
      %1445 = vmatprep.subr.mxu0 0.0
      %1446 = vmatpush1.msra.mxu0 %v1401
      %1447 = vmatprep.subr.mxu0 0.0
      %1448 = vmatpush1.msra.mxu0 %v1400
      %1449 = vmatprep.subr.mxu0 0.0
      %1450 = vmatpush2.msra.mxu0 0.0
      %1451 = vmatprep.subr.mxu0 0.0
      %1452 = vmatpush2.msra.mxu0 0.0
      %1453 = vmatprep.subr.mxu0 0.0
      %1454 = vmatpush2.msra.mxu0 0.0
      %1455 = vmatprep.subr.mxu0 0.0
      %1456 = vmatpush2.msra.mxu0 0.0
      %1457 = vmatprep.subr.mxu0 0.0
      %1458 = vmatpush2.msra.mxu0 0.0
      %1459 = vmatprep.subr.mxu0 0.0
      %1460 = vmatpush2.msra.mxu0 0.0
      %1461 = vmatprep.subr.mxu0 0.0
      %1462 = vmatpush2.msra.mxu0 0.0
      %1463 = vmatprep.subr.mxu0 0.0
      %1464 = vmatpush2.msra.mxu0 0.0
      %1465 = vmatprep.subr.mxu0 0.0
      %1466 = vmatpush2.msra.mxu0 0.0
      %1467 = vmatprep.subr.mxu0 0.0
      %1468 = vmatpush2.msra.mxu0 0.0
      %1469 = vmatprep.subr.mxu0 0.0
      %1470 = vmatpush2.msra.mxu0 0.0
      %1471 = vmatprep.subr.mxu0 0.0
      %1472 = vmatpush2.msra.mxu0 0.0
      %1473 = vmatprep.subr.mxu0 0.0
      %1474 = vmatpush2.msra.mxu0 0.0
      %1475 = vmatprep.subr.mxu0 0.0
      %1476 = vmatpush2.msra.mxu0 0.0
      %1477 = vmatprep.subr.mxu0 0.0
      %1478 = vmatpush2.msra.mxu0 0.0
      %1479 = vmatprep.subr.mxu0 0.0
      %1480 = vmatpush2.msra.mxu0 0.0
      %1481 = vmatprep.mubr.f32.mxu0 0.0
      %1482 = vmatmul.mubr.f32.gmra.mxu0 %v1412
      %v1483 = vpop.f32.mrf.mxu0
      %v1484 = vadd.f32 %v1409, %v1483
      %v1485 = vpop.f32.mrf.mxu0
      %1486 = vmatprep.mubr.f32.mxu0 0.0
      %1487 = vmatmul.mubr.f32.gmra.mxu0 %v1415
      %v1488 = vpop.f32.mrf.mxu0
      %v1489 = vadd.f32 %v1409, %v1488
      %v1490 = vpop.f32.mrf.mxu0
      %1491 = vdwg.mxu0
      %v1493 = vsel %vm1309, %v1398, 0
      %v1496 = vsel %vm1309, %v1399, 0
      %1498 = vmatprep.subr.mxu0 0.0
      %1499 = vmatpush1.msra.mxu0 0.0
      %1500 = vmatprep.subr.mxu0 0.0
      %1501 = vmatpush1.msra.mxu0 0.0
      %1502 = vmatprep.subr.mxu0 0.0
      %1503 = vmatpush1.msra.mxu0 0.0
      %1504 = vmatprep.subr.mxu0 0.0
      %1505 = vmatpush1.msra.mxu0 0.0
      %1506 = vmatprep.subr.mxu0 0.0
      %1507 = vmatpush1.msra.mxu0 0.0
      %1508 = vmatprep.subr.mxu0 0.0
      %1509 = vmatpush1.msra.mxu0 0.0
      %1510 = vmatprep.subr.mxu0 0.0
      %1511 = vmatpush1.msra.mxu0 0.0
      %1512 = vmatprep.subr.mxu0 0.0
      %1513 = vmatpush1.msra.mxu0 0.0
      %1514 = vmatprep.subr.mxu0 0.0
      %1515 = vmatpush1.msra.mxu0 0.0
      %1516 = vmatprep.subr.mxu0 0.0
      %1517 = vmatpush1.msra.mxu0 0.0
      %1518 = vmatprep.subr.mxu0 0.0
      %1519 = vmatpush1.msra.mxu0 0.0
      %1520 = vmatprep.subr.mxu0 0.0
      %1521 = vmatpush1.msra.mxu0 0.0
      %1522 = vmatprep.subr.mxu0 0.0
      %1523 = vmatpush1.msra.mxu0 %v1403
      %1524 = vmatprep.subr.mxu0 0.0
      %1525 = vmatpush1.msra.mxu0 %v1402
      %1526 = vmatprep.subr.mxu0 0.0
      %1527 = vmatpush1.msra.mxu0 %v1401
      %1528 = vmatprep.subr.mxu0 0.0
      %1529 = vmatpush1.msra.mxu0 %v1400
      %1530 = vmatprep.subr.mxu0 0.0
      %1531 = vmatpush2.msra.mxu0 0.0
      %1532 = vmatprep.subr.mxu0 0.0
      %1533 = vmatpush2.msra.mxu0 0.0
      %1534 = vmatprep.subr.mxu0 0.0
      %1535 = vmatpush2.msra.mxu0 0.0
      %1536 = vmatprep.subr.mxu0 0.0
      %1537 = vmatpush2.msra.mxu0 0.0
      %1538 = vmatprep.subr.mxu0 0.0
      %1539 = vmatpush2.msra.mxu0 0.0
      %1540 = vmatprep.subr.mxu0 0.0
      %1541 = vmatpush2.msra.mxu0 0.0
      %1542 = vmatprep.subr.mxu0 0.0
      %1543 = vmatpush2.msra.mxu0 0.0
      %1544 = vmatprep.subr.mxu0 0.0
      %1545 = vmatpush2.msra.mxu0 0.0
      %1546 = vmatprep.subr.mxu0 0.0
      %1547 = vmatpush2.msra.mxu0 0.0
      %1548 = vmatprep.subr.mxu0 0.0
      %1549 = vmatpush2.msra.mxu0 0.0
      %1550 = vmatprep.subr.mxu0 0.0
      %1551 = vmatpush2.msra.mxu0 0.0
      %1552 = vmatprep.subr.mxu0 0.0
      %1553 = vmatpush2.msra.mxu0 0.0
      %1554 = vmatprep.subr.mxu0 0.0
      %1555 = vmatpush2.msra.mxu0 0.0
      %1556 = vmatprep.subr.mxu0 0.0
      %1557 = vmatpush2.msra.mxu0 0.0
      %1558 = vmatprep.subr.mxu0 0.0
      %1559 = vmatpush2.msra.mxu0 0.0
      %1560 = vmatprep.subr.mxu0 0.0
      %1561 = vmatpush2.msra.mxu0 0.0
      %1562 = vmatprep.mubr.f32.mxu0 0.0
      %1563 = vmatmul.mubr.f32.gmra.mxu0 %v1493
      %v1564 = vpop.f32.mrf.mxu0
      %v1565 = vadd.f32 %v1409, %v1564
      %v1566 = vpop.f32.mrf.mxu0
      %1567 = vmatprep.mubr.f32.mxu0 0.0
      %1568 = vmatmul.mubr.f32.gmra.mxu0 %v1496
      %v1569 = vpop.f32.mrf.mxu0
      %v1570 = vadd.f32 %v1409, %v1569
      %v1571 = vpop.f32.mrf.mxu0
      %1572 = vdwg.mxu0
      %v1573 = vsel %vm1309, %v1484, 0.0
      %1574 = vadd.xlane.f32.xlu0 %v1573
      %v1575 = vpop.xlane.xlu0 %1574
      %v1576 = vsel %vm1313, %v1489, 0.0
      %1577 = vadd.xlane.f32.xlu0 %v1576
      %v1578 = vpop.xlane.xlu0 %1577
      %v1579 = vadd.f32 %v1575, 0.0
      %v1580 = vadd.f32 %v1578, 0.0
      %v1581 = vsel %vm1309, %v1565, 0.0
      %1582 = vadd.xlane.f32.xlu0 %v1581
      %v1583 = vpop.xlane.xlu0 %1582
      %v1584 = vsel %vm1313, %v1570, 0.0
      %1585 = vadd.xlane.f32.xlu0 %v1584
      %v1586 = vpop.xlane.xlu0 %1585
      %v1587 = vadd.f32 %v1579, %v1583
      %v1588 = vadd.f32 %v1580, %v1586
      %v1589 = vmul.f32 %v1587, %v1327
      %v1590 = vmul.f32 %v1588, %v1327
      %v1591 = vsub.f32 %v1484, %v1589
      %v1592 = vsub.f32 %v1489, %v1590
      %v1593 = vsub.f32 %v1565, %v1589
      %v1594 = vsub.f32 %v1570, %v1590
      %v1595 = vmul.f32 %v1591, %v1591
      %v1596 = vmul.f32 %v1592, %v1592
      %v1597 = vsel %vm1309, %v1595, 0.0
      %1598 = vadd.xlane.f32.xlu0 %v1597
      %v1599 = vpop.xlane.xlu0 %1598
      %v1600 = vsel %vm1313, %v1596, 0.0
      %1601 = vadd.xlane.f32.xlu0 %v1600
      %v1602 = vpop.xlane.xlu0 %1601
      %v1603 = vadd.f32 %v1599, 0.0
      %v1604 = vadd.f32 %v1602, 0.0
      %v1605 = vmul.f32 %v1593, %v1593
      %v1606 = vmul.f32 %v1594, %v1594
      %v1607 = vsel %vm1309, %v1605, 0.0
      %1608 = vadd.xlane.f32.xlu0 %v1607
      %v1609 = vpop.xlane.xlu0 %1608
      %v1610 = vsel %vm1313, %v1606, 0.0
      %1611 = vadd.xlane.f32.xlu0 %v1610
      %v1612 = vpop.xlane.xlu0 %1611
      %v1613 = vadd.f32 %v1603, %v1609
      %v1614 = vadd.f32 %v1604, %v1612
      %v1615 = vmul.f32 %v1613, %v1327
      %v1616 = vmul.f32 %v1614, %v1327
      %v1617 = vadd.f32 %v1615, 1e-05
      %v1618 = vadd.f32 %v1616, 1e-05
      %v1619 = vrsqrt.pop %v1617
      %v1620 = vrsqrt.pop %v1618
      %s1621 = scalar_lea.vmem %s585, 16
      %v1622 = vld [vmem:[%s1621] sm:$0xff]
      %v1623 = vld [vmem:[%s1621 + $0x8] sm:$0x1]
      %s1624 = scalar_lea.vmem %s590, 16
      %v1625 = vld [vmem:[%s1624] sm:$0xff]
      %v1626 = vld [vmem:[%s1624 + $0x8] sm:$0x1]
      %v1627 = vmul.f32 %v1591, %v1619
      %v1628 = vmul.f32 %v1592, %v1620
      %1630 = vset.pattern.permute.xlu0 0
      %1631 = vperm.xlu0 %1630, %v1622
      %v1632 = vpop.permute.xlu0 %1631
      %1635 = vset.pattern.permute.xlu0 0
      %1636 = vperm.xlu0 %1635, %v1623
      %v1637 = vpop.permute.xlu0 %1636
      %v1639 = vmul.f32 %v1627, %v1632
      %v1640 = vmul.f32 %v1628, %v1637
      %1642 = vset.pattern.permute.xlu0 0
      %1643 = vperm.xlu0 %1642, %v1625
      %v1644 = vpop.permute.xlu0 %1643
      %1647 = vset.pattern.permute.xlu0 0
      %1648 = vperm.xlu0 %1647, %v1626
      %v1649 = vpop.permute.xlu0 %1648
      %v1651 = vadd.f32 %v1639, %v1644
      %v1652 = vadd.f32 %v1640, %v1649
      %v1653 = vmax.f32 %v1651, 0.0
      %v1654 = vmax.f32 %v1652, 0.0
      %v1655 = vmul.f32 %v1593, %v1619
      %v1656 = vmul.f32 %v1594, %v1620
      %v1657 = vmul.f32 %v1655, %v1632
      %v1658 = vmul.f32 %v1656, %v1637
      %v1659 = vadd.f32 %v1657, %v1644
      %v1660 = vadd.f32 %v1658, %v1649
      %v1661 = vmax.f32 %v1659, 0.0
      %v1662 = vmax.f32 %v1660, 0.0
      %v1663 = vld [vmem:[%s617] sm:$0xff]
      %v1664 = vld [vmem:[%s617 + $0x8] sm:$0xff]
      %v1665 = vld [vmem:[%s617 + $0x10] sm:$0xff]
      %v1666 = vld [vmem:[%s617 + $0x18] sm:$0xff]
      %v1667 = vld [vmem:[%s620] sm:$0x1]
      %v1669 = vlaneseq
      %v1670 = vshrl.u32 %v1669, 7
      %v1671 = vsub.s32 0, %v1670
      %v1672 = vrot.slane %v1667, %v1671
      %v1675 = vsel %vm1309, %v1653, 0
      %v1678 = vsel %vm1309, %v1654, 0
      %1680 = vmatprep.subr.mxu0 0.0
      %1681 = vmatpush1.msra.mxu0 0.0
      %1682 = vmatprep.subr.mxu0 0.0
      %1683 = vmatpush1.msra.mxu0 0.0
      %1684 = vmatprep.subr.mxu0 0.0
      %1685 = vmatpush1.msra.mxu0 0.0
      %1686 = vmatprep.subr.mxu0 0.0
      %1687 = vmatpush1.msra.mxu0 0.0
      %1688 = vmatprep.subr.mxu0 0.0
      %1689 = vmatpush1.msra.mxu0 0.0
      %1690 = vmatprep.subr.mxu0 0.0
      %1691 = vmatpush1.msra.mxu0 0.0
      %1692 = vmatprep.subr.mxu0 0.0
      %1693 = vmatpush1.msra.mxu0 0.0
      %1694 = vmatprep.subr.mxu0 0.0
      %1695 = vmatpush1.msra.mxu0 0.0
      %1696 = vmatprep.subr.mxu0 0.0
      %1697 = vmatpush1.msra.mxu0 0.0
      %1698 = vmatprep.subr.mxu0 0.0
      %1699 = vmatpush1.msra.mxu0 0.0
      %1700 = vmatprep.subr.mxu0 0.0
      %1701 = vmatpush1.msra.mxu0 0.0
      %1702 = vmatprep.subr.mxu0 0.0
      %1703 = vmatpush1.msra.mxu0 0.0
      %1704 = vmatprep.subr.mxu0 0.0
      %1705 = vmatpush1.msra.mxu0 %v1666
      %1706 = vmatprep.subr.mxu0 0.0
      %1707 = vmatpush1.msra.mxu0 %v1665
      %1708 = vmatprep.subr.mxu0 0.0
      %1709 = vmatpush1.msra.mxu0 %v1664
      %1710 = vmatprep.subr.mxu0 0.0
      %1711 = vmatpush1.msra.mxu0 %v1663
      %1712 = vmatprep.subr.mxu0 0.0
      %1713 = vmatpush2.msra.mxu0 0.0
      %1714 = vmatprep.subr.mxu0 0.0
      %1715 = vmatpush2.msra.mxu0 0.0
      %1716 = vmatprep.subr.mxu0 0.0
      %1717 = vmatpush2.msra.mxu0 0.0
      %1718 = vmatprep.subr.mxu0 0.0
      %1719 = vmatpush2.msra.mxu0 0.0
      %1720 = vmatprep.subr.mxu0 0.0
      %1721 = vmatpush2.msra.mxu0 0.0
      %1722 = vmatprep.subr.mxu0 0.0
      %1723 = vmatpush2.msra.mxu0 0.0
      %1724 = vmatprep.subr.mxu0 0.0
      %1725 = vmatpush2.msra.mxu0 0.0
      %1726 = vmatprep.subr.mxu0 0.0
      %1727 = vmatpush2.msra.mxu0 0.0
      %1728 = vmatprep.subr.mxu0 0.0
      %1729 = vmatpush2.msra.mxu0 0.0
      %1730 = vmatprep.subr.mxu0 0.0
      %1731 = vmatpush2.msra.mxu0 0.0
      %1732 = vmatprep.subr.mxu0 0.0
      %1733 = vmatpush2.msra.mxu0 0.0
      %1734 = vmatprep.subr.mxu0 0.0
      %1735 = vmatpush2.msra.mxu0 0.0
      %1736 = vmatprep.subr.mxu0 0.0
      %1737 = vmatpush2.msra.mxu0 0.0
      %1738 = vmatprep.subr.mxu0 0.0
      %1739 = vmatpush2.msra.mxu0 0.0
      %1740 = vmatprep.subr.mxu0 0.0
      %1741 = vmatpush2.msra.mxu0 0.0
      %1742 = vmatprep.subr.mxu0 0.0
      %1743 = vmatpush2.msra.mxu0 0.0
      %1744 = vmatprep.mubr.f32.mxu0 0.0
      %1745 = vmatmul.mubr.f32.gmra.mxu0 %v1675
      %v1746 = vpop.f32.mrf.mxu0
      %v1747 = vadd.f32 %v1672, %v1746
      %v1748 = vpop.f32.mrf.mxu0
      %1749 = vmatprep.mubr.f32.mxu0 0.0
      %1750 = vmatmul.mubr.f32.gmra.mxu0 %v1678
      %v1751 = vpop.f32.mrf.mxu0
      %v1752 = vadd.f32 %v1672, %v1751
      %v1753 = vpop.f32.mrf.mxu0
      %1754 = vdwg.mxu0
      %v1756 = vsel %vm1309, %v1661, 0
      %v1759 = vsel %vm1309, %v1662, 0
      %1761 = vmatprep.subr.mxu0 0.0
      %1762 = vmatpush1.msra.mxu0 0.0
      %1763 = vmatprep.subr.mxu0 0.0
      %1764 = vmatpush1.msra.mxu0 0.0
      %1765 = vmatprep.subr.mxu0 0.0
      %1766 = vmatpush1.msra.mxu0 0.0
      %1767 = vmatprep.subr.mxu0 0.0
      %1768 = vmatpush1.msra.mxu0 0.0
      %1769 = vmatprep.subr.mxu0 0.0
      %1770 = vmatpush1.msra.mxu0 0.0
      %1771 = vmatprep.subr.mxu0 0.0
      %1772 = vmatpush1.msra.mxu0 0.0
      %1773 = vmatprep.subr.mxu0 0.0
      %1774 = vmatpush1.msra.mxu0 0.0
      %1775 = vmatprep.subr.mxu0 0.0
      %1776 = vmatpush1.msra.mxu0 0.0
      %1777 = vmatprep.subr.mxu0 0.0
      %1778 = vmatpush1.msra.mxu0 0.0
      %1779 = vmatprep.subr.mxu0 0.0
      %1780 = vmatpush1.msra.mxu0 0.0
      %1781 = vmatprep.subr.mxu0 0.0
      %1782 = vmatpush1.msra.mxu0 0.0
      %1783 = vmatprep.subr.mxu0 0.0
      %1784 = vmatpush1.msra.mxu0 0.0
      %1785 = vmatprep.subr.mxu0 0.0
      %1786 = vmatpush1.msra.mxu0 %v1666
      %1787 = vmatprep.subr.mxu0 0.0
      %1788 = vmatpush1.msra.mxu0 %v1665
      %1789 = vmatprep.subr.mxu0 0.0
      %1790 = vmatpush1.msra.mxu0 %v1664
      %1791 = vmatprep.subr.mxu0 0.0
      %1792 = vmatpush1.msra.mxu0 %v1663
      %1793 = vmatprep.subr.mxu0 0.0
      %1794 = vmatpush2.msra.mxu0 0.0
      %1795 = vmatprep.subr.mxu0 0.0
      %1796 = vmatpush2.msra.mxu0 0.0
      %1797 = vmatprep.subr.mxu0 0.0
      %1798 = vmatpush2.msra.mxu0 0.0
      %1799 = vmatprep.subr.mxu0 0.0
      %1800 = vmatpush2.msra.mxu0 0.0
      %1801 = vmatprep.subr.mxu0 0.0
      %1802 = vmatpush2.msra.mxu0 0.0
      %1803 = vmatprep.subr.mxu0 0.0
      %1804 = vmatpush2.msra.mxu0 0.0
      %1805 = vmatprep.subr.mxu0 0.0
      %1806 = vmatpush2.msra.mxu0 0.0
      %1807 = vmatprep.subr.mxu0 0.0
      %1808 = vmatpush2.msra.mxu0 0.0
      %1809 = vmatprep.subr.mxu0 0.0
      %1810 = vmatpush2.msra.mxu0 0.0
      %1811 = vmatprep.subr.mxu0 0.0
      %1812 = vmatpush2.msra.mxu0 0.0
      %1813 = vmatprep.subr.mxu0 0.0
      %1814 = vmatpush2.msra.mxu0 0.0
      %1815 = vmatprep.subr.mxu0 0.0
      %1816 = vmatpush2.msra.mxu0 0.0
      %1817 = vmatprep.subr.mxu0 0.0
      %1818 = vmatpush2.msra.mxu0 0.0
      %1819 = vmatprep.subr.mxu0 0.0
      %1820 = vmatpush2.msra.mxu0 0.0
      %1821 = vmatprep.subr.mxu0 0.0
      %1822 = vmatpush2.msra.mxu0 0.0
      %1823 = vmatprep.subr.mxu0 0.0
      %1824 = vmatpush2.msra.mxu0 0.0
      %1825 = vmatprep.mubr.f32.mxu0 0.0
      %1826 = vmatmul.mubr.f32.gmra.mxu0 %v1756
      %v1827 = vpop.f32.mrf.mxu0
      %v1828 = vadd.f32 %v1672, %v1827
      %v1829 = vpop.f32.mrf.mxu0
      %1830 = vmatprep.mubr.f32.mxu0 0.0
      %1831 = vmatmul.mubr.f32.gmra.mxu0 %v1759
      %v1832 = vpop.f32.mrf.mxu0
      %v1833 = vadd.f32 %v1672, %v1832
      %v1834 = vpop.f32.mrf.mxu0
      %1835 = vdwg.mxu0
      %v1836 = vxor.u32 %v1747, 2147483648
      %v1837 = vxor.u32 %v1752, 2147483648
      %v1838 = vmul.f32 %v1836, 1.442695
      %v1839 = vpow.pop %v1838
      %v1840 = vmul.f32 %v1837, 1.442695
      %v1841 = vpow.pop %v1840
      %v1842 = vadd.f32 %v1839, 1.0
      %v1843 = vadd.f32 %v1841, 1.0
      %v1844 = vrcp.pop %v1842
      %v1845 = vmul.f32 1.0, %v1844
      %v1846 = vrcp.pop %v1843
      %v1847 = vmul.f32 1.0, %v1846
      %1850 = vrot.lane.b32.xlu0 %v1747, 120
      %v1851 = vpop.permute.xlu0 %1850
      %1852 = vrot.lane.b32.xlu0 %v1752, 120
      %v1853 = vpop.permute.xlu0 %1852
      %v1856 = vadd.f32 %v710, %v1851
      %v1857 = vadd.f32 %v711, %v1853
      %v1858 = vmul.f32 %v734, %v1856
      %v1859 = vmul.f32 %v735, %v1857
      %v1860 = vmul.f32 %v1858, %v1845
      %v1861 = vmul.f32 %v1859, %v1847
      %v1862 = vadd.f32 %v736, %v1860
      %v1863 = vadd.f32 %v737, %v1861
      %1864 = vst.msk [vmem:[#allocation2] sm:$0xff] %vm642, %v1862
      %1865 = vst.msk [vmem:[#allocation2 + $0x8] sm:$0x1] %vm646, %v1863
      %v1866 = vand.u32 2147483647, %v1845
      %v1867 = vand.u32 2147483647, %v1847
      %v1868 = vlog2.pop %v1866
      %v1869 = vmul.f32 %v1868, 0.6931472
      %v1870 = vlog2.pop %v1867
      %v1871 = vmul.f32 %v1870, 0.6931472
      %v1872 = vsel %vm642, %v1869, 0.0
      %1873 = vadd.xlane.f32.xlu0 %v1872
      %v1874 = vpop.xlane.xlu0 %1873
      %v1875 = vsel %vm646, %v1871, 0.0
      %1876 = vadd.xlane.f32.xlu0 %v1875
      %v1877 = vpop.xlane.xlu0 %1876
      %v1878 = vsel %vm722, %v1877, 0.0
      %v1879 = vadd.f32 %v1874, %v1878
      %v1880 = vrot.slane %v1879, 4
      %v1881 = vadd.f32 %v1879, %v1880
      %v1882 = vrot.slane %v1881, 2
      %v1883 = vadd.f32 %v1881, %v1882
      %v1884 = vrot.slane %v1883, 1
      %v1885 = vadd.f32 %v1883, %v1884
      %v1886 = vxor.u32 %v1828, 2147483648
      %v1887 = vxor.u32 %v1833, 2147483648
      %v1888 = vmul.f32 %v1886, 1.442695
      %v1889 = vpow.pop %v1888
      %v1890 = vmul.f32 %v1887, 1.442695
      %v1891 = vpow.pop %v1890
      %v1892 = vadd.f32 %v1889, 1.0
      %v1893 = vadd.f32 %v1891, 1.0
      %v1894 = vrcp.pop %v1892
      %v1895 = vmul.f32 1.0, %v1894
      %v1896 = vrcp.pop %v1893
      %v1897 = vmul.f32 1.0, %v1896
      %1900 = vrot.lane.b32.xlu0 %v1828, 120
      %v1901 = vpop.permute.xlu0 %1900
      %1902 = vrot.lane.b32.xlu0 %v1833, 120
      %v1903 = vpop.permute.xlu0 %1902
      %v1906 = vadd.f32 %v712, %v1901
      %v1907 = vadd.f32 %v713, %v1903
      %v1908 = vmul.f32 %v734, %v1906
      %v1909 = vmul.f32 %v735, %v1907
      %v1910 = vmul.f32 %v1908, %v1895
      %v1911 = vmul.f32 %v1909, %v1897
      %v1912 = vadd.f32 %v738, %v1910
      %v1913 = vadd.f32 %v739, %v1911
      %1914 = vst.msk [vmem:[%s639] sm:$0xff] %vm642, %v1912
      %1915 = vst.msk [vmem:[%s639 + $0x8] sm:$0x1] %vm646, %v1913
      %v1916 = vand.u32 2147483647, %v1895
      %v1917 = vand.u32 2147483647, %v1897
      %v1918 = vlog2.pop %v1916
      %v1919 = vmul.f32 %v1918, 0.6931472
      %v1920 = vlog2.pop %v1917
      %v1921 = vmul.f32 %v1920, 0.6931472
      %v1922 = vsel %vm642, %v1919, 0.0
      %1923 = vadd.xlane.f32.xlu0 %v1922
      %v1924 = vpop.xlane.xlu0 %1923
      %v1925 = vsel %vm646, %v1921, 0.0
      %1926 = vadd.xlane.f32.xlu0 %v1925
      %v1927 = vpop.xlane.xlu0 %1926
      %v1928 = vsel %vm722, %v1927, 0.0
      %v1929 = vadd.f32 %v1924, %v1928
      %v1930 = vrot.slane %v1929, 4
      %v1931 = vadd.f32 %v1929, %v1930
      %v1932 = vrot.slane %v1931, 2
      %v1933 = vadd.f32 %v1931, %v1932
      %v1934 = vrot.slane %v1933, 1
      %v1935 = vadd.f32 %v1933, %v1934
      %v1936 = vsel %vm722, %v1885, %v1935
      %v1937 = vld [vmem:[#allocation3] sm:$0x3]
      %v1938 = vadd.f32 %v1937, %v1936
      %v1939 = vadd.f32 %v1938, %v731
      %vm1940 = vcmask 1024
      %1941 = vst.msk [vmem:[#allocation3] sm:$0x3] %vm1940, %v1939
      %p1942 = scmp.eq.s32.totalorder %s26, 1
      // Predicated region
      $region77: #{tpu_custom_call.1} parent=71 // pred_check
        %p1943 = pneg %p1942
      $region78: #{tpu_custom_call.1} parent=71 // pred_check_branch
        %1945 = sbr.rel (%p1943) target = $region80
      $region79: #{tpu_custom_call.1} parent=71 // pred_region
        %v1946 = vld [vmem:[#allocation2] sm:$0xff]
        %v1947 = vld [vmem:[#allocation2 + $0x8] sm:$0x1]
        %v1948 = vld [vmem:[#allocation2 + $0x10] sm:$0xff]
        %v1949 = vld [vmem:[#allocation2 + $0x18] sm:$0x1]
        %1950 = vst.msk [vmem:[%s13] sm:$0xff] %vm642, %v1946
        %1951 = vst.msk [vmem:[%s13 + $0x8] sm:$0x1] %vm646, %v1947
        %1952 = vst.msk [vmem:[%s13 + $0x10] sm:$0xff] %vm642, %v1948
        %1953 = vst.msk [vmem:[%s13 + $0x18] sm:$0x1] %vm646, %v1949
        %v1954 = vld [vmem:[#allocation3] sm:$0x3]
        %1955 = vst.msk [vmem:[%s14] sm:$0x3] %vm1940, %v1954
      $region80: #{tpu_custom_call.1} parent=71 // pred_fallthru
        _
      // Predicated region
      $region81: #{tpu_custom_call.1} parent=71 // pred_check
        %p1956 = pneg %p367
      $region82: #{tpu_custom_call.1} parent=71 // pred_check_branch
        %1958 = sbr.rel (%p1956) target = $region84
      $region83: #{tpu_custom_call.1} parent=71 // pred_region
        _
      $region84: #{tpu_custom_call.1} parent=71 // pred_fallthru
        _
      // Predicated region
      $region85: #{tpu_custom_call.1} parent=71 // pred_check
        %p1959 = pneg %p388
      $region86: #{tpu_custom_call.1} parent=71 // pred_check_branch
        %1961 = sbr.rel (%p1959) target = $region88
      $region87: #{tpu_custom_call.1} parent=71 // pred_region
        _
      $region88: #{tpu_custom_call.1} parent=71 // pred_fallthru
        _
      // Predicated region
      $region89: #{tpu_custom_call.1} parent=71 // pred_check
        %p1962 = pneg %p367
      $region90: #{tpu_custom_call.1} parent=71 // pred_check_branch
        %1964 = sbr.rel (%p1962) target = $region92
      $region91: #{tpu_custom_call.1} parent=71 // pred_region
        _
      $region92: #{tpu_custom_call.1} parent=71 // pred_fallthru
        _
      // Predicated region
      $region93: #{tpu_custom_call.1} parent=71 // pred_check
        %p1965 = pneg %p388
      $region94: #{tpu_custom_call.1} parent=71 // pred_check_branch
        %1967 = sbr.rel (%p1965) target = $region96
      $region95: #{tpu_custom_call.1} parent=71 // pred_region
        _
      $region96: #{tpu_custom_call.1} parent=71 // pred_fallthru
        _
    $region72: #{tpu_custom_call.1} parent=5 // pred_fallthru
      _
    %p1968 = scmp.le.s32.totalorder 2, %s21
    // Predicated region
    $region97: #{tpu_custom_call.1} parent=5 // pred_check
      %p1969 = pneg %p1968
    $region98: #{tpu_custom_call.1} parent=5 // pred_check_branch
      %1971 = sbr.rel (%p1969) target = $region100
    $region99: #{tpu_custom_call.1} parent=5 // pred_region
      %s1972 = ssub.s32 %s21, 2
    $region100: #{tpu_custom_call.1} parent=5 // pred_fallthru
      _
  $region6: #{tpu_custom_call.1} parent=0 // loop_footer
    %s25 = sadd.s32 1, %s21
  $region7: #{tpu_custom_call.1} parent=0 // loop_footer_branch
    %20 = sbr.rel target = $region3
  $region8: #{tpu_custom_call.1} parent=0 // loop_exit
    _

</llo_original>
